<compile_context>
chip_gen: v6e
topology: v6e:2x2x1
jax: 0.10.0
libtpu: 0.0.40
codegen_flags: <defaults>
</compile_context>

<pallas_src>
import functools

import jax
import jax.numpy as jnp
from jax import lax
from jax.experimental import pallas as pl
from jax.experimental.pallas import tpu as pltpu


def _downlink_kernel(x_ref, wih_ref, whh_ref, bias_ref,
                     fcw_ref, fcb_ref, qw_hbm, qb_ref,
                     d1w_hbm, d1b_ref, d2w_hbm, d2b_ref,
                     out_ref,
                     qw_vmem, d1w_vmem, d2w_vmem, dma_sem,
                     *, sqrt_power):
    """Whole forward pass in one kernel invocation (everything fits in VMEM)."""
    T, B, D = x_ref.shape                        # time-major, batch padded to 8k
    H = whh_ref.shape[0]

    # ---- Kick off epilogue-weight DMAs immediately; wait right before use so
    # they overlap the projection + recurrence below.
    cp_q = pltpu.make_async_copy(qw_hbm, qw_vmem, dma_sem.at[0])
    cp_d1 = pltpu.make_async_copy(d1w_hbm, d1w_vmem, dma_sem.at[1])
    cp_d2 = pltpu.make_async_copy(d2w_hbm, d2w_vmem, dma_sem.at[2])
    cp_q.start()
    cp_d1.start()
    cp_d2.start()

    whh = whh_ref[...]                           # (H, 4H) recurrent weight

    # ---- Hoisted input projection: one big matmul + bias, outside the loop.
    x2d = x_ref[...].reshape(T * B, D)           # (T*B, D), no-op relayout
    x_proj = (jnp.dot(x2d, wih_ref[...], preferred_element_type=jnp.float32)
              + bias_ref[...])                   # (T*B, 4H)
    x_proj = x_proj.reshape(T, B, 4 * H)         # time-major: [t] is aligned

    # Lane mask selecting the "g" (cell candidate) gate block; hoisted.
    lane = lax.broadcasted_iota(jnp.int32, (B, 4 * H), 1)
    gate_is_g = (lane >= 2 * H) & (lane < 3 * H)
    pre_scale = jnp.where(gate_is_g, 1.0, 0.5)   # tanh(x) vs tanh(x/2) lanes

    # ---- LSTM recurrence, fully unrolled over T (static).
    # PyTorch LSTM gate order: input, forget, cell(g), output.
    h = jnp.zeros((B, H), jnp.float32)
    c = jnp.zeros((B, H), jnp.float32)
    for t in range(T):
        gates = x_proj[t] + jnp.dot(h, whh, preferred_element_type=jnp.float32)
        # Single EUP pass: sigmoid(x) = 0.5*(1 + tanh(x/2)); g lanes keep tanh.
        th = jnp.tanh(gates * pre_scale)
        acts = jnp.where(gate_is_g, th, 0.5 * th + 0.5)
        i_g = acts[:, 0 * H:1 * H]
        f_g = acts[:, 1 * H:2 * H]
        g_g = acts[:, 2 * H:3 * H]
        o_g = acts[:, 3 * H:4 * H]
        c = f_g * c + i_g * g_g
        h = o_g * jnp.tanh(c)

    # ---- fc on last LSTM output (dropout == identity in eval mode).
    v_pred = (jnp.dot(h, fcw_ref[...], preferred_element_type=jnp.float32)
              + fcb_ref[...])                    # (B, D)

    # Per-row power normalization: v * sqrt(Power) / ||v||_2   (rsqrt on EUP).
    sumsq = jnp.sum(v_pred * v_pred, axis=1, keepdims=True)
    v_norm = v_pred * (sqrt_power * lax.rsqrt(sumsq))

    # relu(qual(v_norm)) — wait only on the weight we need next.
    cp_q.wait()
    qual = jnp.maximum(
        jnp.dot(v_norm, qw_vmem[...], preferred_element_type=jnp.float32)
        + qb_ref[...], 0.0)                      # (B, BW)

    # tanh(dfc2(dfc1(qual)))
    cp_d1.wait()
    v1 = (jnp.dot(qual, d1w_vmem[...], preferred_element_type=jnp.float32)
          + d1b_ref[...])                        # (B, D)
    cp_d2.wait()
    v2 = (jnp.dot(v1, d2w_vmem[...], preferred_element_type=jnp.float32)
          + d2b_ref[...])                        # (B, D)
    out_ref[...] = jnp.tanh(v2)


def downlink_lstm_forward(h_dl, params, power):
    """h_dl: (B, T, D) float32, batch-first like the PyTorch module."""
    B, T, D = h_dl.shape
    H = params["w_hh_t"].shape[0]
    BW = params["qual_w_t"].shape[1]
    out_dim = params["fc_w_t"].shape[1]

    # Pad batch to a sublane multiple (8) so vregs are fully occupied and the
    # output store is unmasked; padded rows are sliced off below.
    B_pad = max(8, ((B + 7) // 8) * 8)
    if B_pad != B:
        h_dl = jnp.pad(h_dl, ((0, B_pad - B), (0, 0), (0, 0)))
    # Time-major so each step's gate fetch is an aligned static sublane slice.
    x_tm = jnp.transpose(h_dl, (1, 0, 2))        # (T, B_pad, D)

    bias = params["b_ih"] + params["b_hh"]       # folded once in the wrapper

    args = (
        x_tm,
        params["w_ih_t"], params["w_hh_t"], bias,
        params["fc_w_t"], params["fc_b"],
        params["qual_w_t"], params["qual_b"],
        params["dfc1_w_t"], params["dfc1_b"],
        params["dfc2_w_t"], params["dfc2_b"],
    )

    vmem = pl.BlockSpec(memory_space=pltpu.MemorySpace.VMEM)
    hbm = pl.BlockSpec(memory_space=pl.ANY)      # manually DMA'd in the kernel
    in_specs = [
        vmem,                    # x (time-major)
        vmem, vmem, vmem,        # w_ih_t, w_hh_t, bias
        vmem, vmem,              # fc_w_t, fc_b
        hbm, vmem,               # qual_w_t (ANY), qual_b
        hbm, vmem,               # dfc1_w_t (ANY), dfc1_b
        hbm, vmem,               # dfc2_w_t (ANY), dfc2_b
    ]

    flops = 2 * (B_pad * T * D * 4 * H           # hoisted input projection
                 + T * B_pad * H * 4 * H         # recurrence
                 + B_pad * (H * out_dim + out_dim * BW
                            + BW * out_dim + out_dim * out_dim))
    transcendentals = T * B_pad * (4 * H + H) + B_pad * (1 + out_dim)
    bytes_accessed = 4 * (x_tm.size
                          + sum(int(a.size) for a in args[1:])
                          + B_pad * out_dim)

    kernel = functools.partial(_downlink_kernel,
                               sqrt_power=float(power) ** 0.5)
    out = pl.pallas_call(
        kernel,
        out_shape=jax.ShapeDtypeStruct((B_pad, out_dim), jnp.float32),
        in_specs=in_specs,
        out_specs=pl.BlockSpec(memory_space=pltpu.MemorySpace.VMEM),
        scratch_shapes=[
            pltpu.VMEM((D, BW), jnp.float32),        # qual weight buffer
            pltpu.VMEM((BW, out_dim), jnp.float32),  # dfc1 weight buffer
            pltpu.VMEM((out_dim, out_dim), jnp.float32),  # dfc2 weight buffer
            pltpu.SemaphoreType.DMA((3,)),
        ],
        cost_estimate=pl.CostEstimate(
            flops=flops,
            transcendentals=transcendentals,
            bytes_accessed=bytes_accessed),
    )(*args)
    return out[:B]


def downlink_lstm_reference(h_dl, params, power):
    """Pure-JAX reference for correctness checking (same math, plain XLA)."""
    B, T, D = h_dl.shape
    H = params["w_hh_t"].shape[0]
    bias = params["b_ih"] + params["b_hh"]

    x_proj = (jnp.dot(h_dl.reshape(B * T, D), params["w_ih_t"],
                      preferred_element_type=jnp.float32)
              + bias).reshape(B, T, 4 * H)

    def step(carry, xp_t):
        h, c = carry
        gates = xp_t + jnp.dot(h, params["w_hh_t"],
                               preferred_element_type=jnp.float32)
        i_g = jax.nn.sigmoid(gates[:, 0 * H:1 * H])
        f_g = jax.nn.sigmoid(gates[:, 1 * H:2 * H])
        g_g = jnp.tanh(gates[:, 2 * H:3 * H])
        o_g = jax.nn.sigmoid(gates[:, 3 * H:4 * H])
        c = f_g * c + i_g * g_g
        h = o_g * jnp.tanh(c)
        return (h, c), None

    h0 = jnp.zeros((B, H), jnp.float32)
    c0 = jnp.zeros((B, H), jnp.float32)
    (h_last, _), _ = lax.scan(step, (h0, c0), jnp.transpose(x_proj, (1, 0, 2)))

    v_pred = (jnp.dot(h_last, params["fc_w_t"],
                      preferred_element_type=jnp.float32) + params["fc_b"])
    sumsq = jnp.sum(v_pred * v_pred, axis=1, keepdims=True)
    v_norm = v_pred * (jnp.sqrt(jnp.float32(power)) * lax.rsqrt(sumsq))
    qual = jnp.maximum(
        jnp.dot(v_norm, params["qual_w_t"],
                preferred_element_type=jnp.float32) + params["qual_b"], 0.0)
    v1 = (jnp.dot(qual, params["dfc1_w_t"],
                  preferred_element_type=jnp.float32) + params["dfc1_b"])
    v2 = (jnp.dot(v1, params["dfc2_w_t"],
                  preferred_element_type=jnp.float32) + params["dfc2_b"])
    return jnp.tanh(v2)


def init_params(key, M, K, hidden_size, bandwidth):
    """Deterministic synthetic parameter init (PyTorch-like shapes, pre-transposed)."""
    D = M * K * 2   # LSTM input size == fc / dfc output size (== 256 here)
    H = hidden_size
    ks = jax.random.split(key, 12)
    s = 0.1

    def rnd(k, shape):
        return jax.random.normal(k, shape, jnp.float32) * s

    return {
        # nn.LSTM: weight_ih_l0 (4H, D), weight_hh_l0 (4H, H) -> pass transposed
        "w_ih_t": rnd(ks[0], (D, 4 * H)),
        "w_hh_t": rnd(ks[1], (H, 4 * H)),
        "b_ih": rnd(ks[2], (1, 4 * H)),
        "b_hh": rnd(ks[3], (1, 4 * H)),
        # fc: Linear(H, D)
        "fc_w_t": rnd(ks[4], (H, D)),
        "fc_b": rnd(ks[5], (1, D)),
        # qual: Linear(256, Bandwidth)  (requires D == 256)
        "qual_w_t": rnd(ks[6], (D, bandwidth)),
        "qual_b": rnd(ks[7], (1, bandwidth)),
        # dfc1: Linear(Bandwidth, D)
        "dfc1_w_t": rnd(ks[8], (bandwidth, D)),
        "dfc1_b": rnd(ks[9], (1, D)),
        # dfc2: Linear(D, D)
        "dfc2_w_t": rnd(ks[10], (D, D)),
        "dfc2_b": rnd(ks[11], (1, D)),
    }


if __name__ == "__main__":
    # Module hyperparameters. forward() requires M*K*2 == 256 (qual has in=256).
    M, K = 16, 8
    hidden_size = 32
    batch = 2
    seq = 8
    Power = 10.0
    Bandwidth = 64
    N0 = 1e-9  # only used by rate_loss, not by forward

    key = jax.random.PRNGKey(0)
    k_param, k_x = jax.random.split(key)
    params = init_params(k_param, M, K, hidden_size, Bandwidth)

    h_dl = jax.random.normal(k_x, (batch, seq, M * K * 2), jnp.float32)

    out = downlink_lstm_forward(h_dl, params, Power)
    out = jax.block_until_ready(out)

    ref = downlink_lstm_reference(h_dl, params, Power)
    assert out.shape == (batch, M * K * 2)
    assert jnp.allclose(out, ref, rtol=1e-3, atol=1e-4), "mismatch vs JAX reference"

    print("KERNEL_OK")
</pallas_src>

<mosaic_0001>
module attributes {stable_mosaic.version = 11 : i64} {
  func.func @_downlink_kernel(%arg0: memref<8x8x256xf32, #tpu.memory_space<vmem>>, %arg1: memref<256x128xf32, #tpu.memory_space<vmem>>, %arg2: memref<32x128xf32, #tpu.memory_space<vmem>>, %arg3: memref<1x128xf32, #tpu.memory_space<vmem>>, %arg4: memref<32x256xf32, #tpu.memory_space<vmem>>, %arg5: memref<1x256xf32, #tpu.memory_space<vmem>>, %arg6: memref<256x64xf32, #tpu.memory_space<any>>, %arg7: memref<1x64xf32, #tpu.memory_space<vmem>>, %arg8: memref<64x256xf32, #tpu.memory_space<any>>, %arg9: memref<1x256xf32, #tpu.memory_space<vmem>>, %arg10: memref<256x256xf32, #tpu.memory_space<any>>, %arg11: memref<1x256xf32, #tpu.memory_space<vmem>>, %arg12: memref<8x256xf32, #tpu.memory_space<vmem>>, %arg13: memref<256x64xf32, #tpu.memory_space<vmem>>, %arg14: memref<64x256xf32, #tpu.memory_space<vmem>>, %arg15: memref<256x256xf32, #tpu.memory_space<vmem>>, %arg16: memref<3x!tpu.dma_semaphore, #tpu.memory_space<semaphore_mem>>) attributes {dimension_semantics = [], scalar_prefetch = 0 : i64, scratch_operands = 4 : i64, tpu.core_type = #tpu.core_type<tc>} {
    %c0_i32 = arith.constant 0 : i32
    %0 = tpu.memref_slice %arg16[%c0_i32] : memref<3x!tpu.dma_semaphore, #tpu.memory_space<semaphore_mem>> -> memref<1x!tpu.dma_semaphore, #tpu.memory_space<semaphore_mem>>
    %1 = tpu.memref_squeeze %0 : memref<1x!tpu.dma_semaphore, #tpu.memory_space<semaphore_mem>> -> memref<!tpu.dma_semaphore, #tpu.memory_space<semaphore_mem>>
    tpu.enqueue_dma source(%arg6 : memref<256x64xf32, #tpu.memory_space<any>>) target(%arg13 : memref<256x64xf32, #tpu.memory_space<vmem>>) target_semaphore(%1 : memref<!tpu.dma_semaphore, #tpu.memory_space<semaphore_mem>>)
    %c1_i32 = arith.constant 1 : i32
    %2 = tpu.memref_slice %arg16[%c1_i32] : memref<3x!tpu.dma_semaphore, #tpu.memory_space<semaphore_mem>> -> memref<1x!tpu.dma_semaphore, #tpu.memory_space<semaphore_mem>>
    %3 = tpu.memref_squeeze %2 : memref<1x!tpu.dma_semaphore, #tpu.memory_space<semaphore_mem>> -> memref<!tpu.dma_semaphore, #tpu.memory_space<semaphore_mem>>
    tpu.enqueue_dma source(%arg8 : memref<64x256xf32, #tpu.memory_space<any>>) target(%arg14 : memref<64x256xf32, #tpu.memory_space<vmem>>) target_semaphore(%3 : memref<!tpu.dma_semaphore, #tpu.memory_space<semaphore_mem>>)
    %c2_i32 = arith.constant 2 : i32
    %4 = tpu.memref_slice %arg16[%c2_i32] : memref<3x!tpu.dma_semaphore, #tpu.memory_space<semaphore_mem>> -> memref<1x!tpu.dma_semaphore, #tpu.memory_space<semaphore_mem>>
    %5 = tpu.memref_squeeze %4 : memref<1x!tpu.dma_semaphore, #tpu.memory_space<semaphore_mem>> -> memref<!tpu.dma_semaphore, #tpu.memory_space<semaphore_mem>>
    tpu.enqueue_dma source(%arg10 : memref<256x256xf32, #tpu.memory_space<any>>) target(%arg15 : memref<256x256xf32, #tpu.memory_space<vmem>>) target_semaphore(%5 : memref<!tpu.dma_semaphore, #tpu.memory_space<semaphore_mem>>)
    %c0 = arith.constant 0 : index
    %c0_0 = arith.constant 0 : index
    %6 = vector.load %arg2[%c0, %c0_0] : memref<32x128xf32, #tpu.memory_space<vmem>>, vector<32x128xf32>
    %c0_1 = arith.constant 0 : index
    %c0_2 = arith.constant 0 : index
    %c0_3 = arith.constant 0 : index
    %7 = vector.load %arg0[%c0_1, %c0_2, %c0_3] : memref<8x8x256xf32, #tpu.memory_space<vmem>>, vector<8x8x256xf32>
    %8 = vector.shape_cast %7 : vector<8x8x256xf32> to vector<64x256xf32>
    %c0_4 = arith.constant 0 : index
    %c0_5 = arith.constant 0 : index
    %9 = vector.load %arg1[%c0_4, %c0_5] : memref<256x128xf32, #tpu.memory_space<vmem>>, vector<256x128xf32>
    %cst = arith.constant dense<0.000000e+00> : vector<64x128xf32>
    %10 = tpu.matmul %8, %9, %cst {dimension_numbers = #tpu.dot_dimension_numbers<[1], [0], [0], [1], [0, 0, 1, 1], [], []>} : vector<64x256xf32>, vector<256x128xf32>, vector<64x128xf32> -> vector<64x128xf32>
    %c0_6 = arith.constant 0 : index
    %c0_7 = arith.constant 0 : index
    %11 = vector.load %arg3[%c0_6, %c0_7] : memref<1x128xf32, #tpu.memory_space<vmem>>, vector<1x128xf32>
    %12 = vector.broadcast %11 : vector<1x128xf32> to vector<64x128xf32>
    %13 = arith.addf %10, %12 : vector<64x128xf32>
    %14 = vector.shape_cast %13 : vector<64x128xf32> to vector<8x8x128xf32>
    %15 = tpu.iota {dimensions = array<i32: 1>} : vector<8x128xi32>
    %c64_i32 = arith.constant 64 : i32
    %16 = vector.broadcast %c64_i32 : i32 to vector<8x128xi32>
    %17 = arith.cmpi sge, %15, %16 : vector<8x128xi32>
    %c96_i32 = arith.constant 96 : i32
    %18 = vector.broadcast %c96_i32 : i32 to vector<8x128xi32>
    %19 = arith.cmpi slt, %15, %18 : vector<8x128xi32>
    %20 = arith.andi %17, %19 : vector<8x128xi1>
    %cst_8 = arith.constant 1.000000e+00 : f32
    %cst_9 = arith.constant 5.000000e-01 : f32
    %21 = vector.broadcast %cst_8 : f32 to vector<8x128xf32>
    %22 = vector.broadcast %cst_9 : f32 to vector<8x128xf32>
    %23 = arith.select %20, %21, %22 : vector<8x128xi1>, vector<8x128xf32>
    %cst_10 = arith.constant 0.000000e+00 : f32
    %24 = vector.broadcast %cst_10 : f32 to vector<8x32xf32>
    %cst_11 = arith.constant 0.000000e+00 : f32
    %25 = vector.broadcast %cst_11 : f32 to vector<8x32xf32>
    %26 = vector.extract_strided_slice %14 {offsets = [0, 0, 0], sizes = [1, 8, 128], strides = [1, 1, 1]} : vector<8x8x128xf32> to vector<1x8x128xf32>
    %27 = vector.shape_cast %26 : vector<1x8x128xf32> to vector<8x128xf32>
    %cst_12 = arith.constant dense<0.000000e+00> : vector<8x128xf32>
    %28 = tpu.matmul %24, %6, %cst_12 {dimension_numbers = #tpu.dot_dimension_numbers<[1], [0], [0], [1], [0, 0, 1, 1], [], []>} : vector<8x32xf32>, vector<32x128xf32>, vector<8x128xf32> -> vector<8x128xf32>
    %29 = arith.addf %27, %28 : vector<8x128xf32>
    %30 = arith.mulf %29, %23 : vector<8x128xf32>
    %31 = math.tanh %30 : vector<8x128xf32>
    %cst_13 = arith.constant 5.000000e-01 : f32
    %32 = vector.broadcast %cst_13 : f32 to vector<8x128xf32>
    %33 = arith.mulf %32, %31 : vector<8x128xf32>
    %cst_14 = arith.constant 5.000000e-01 : f32
    %34 = vector.broadcast %cst_14 : f32 to vector<8x128xf32>
    %35 = arith.addf %33, %34 : vector<8x128xf32>
    %36 = arith.select %20, %31, %35 : vector<8x128xi1>, vector<8x128xf32>
    %37 = vector.extract_strided_slice %36 {offsets = [0, 0], sizes = [8, 32], strides = [1, 1]} : vector<8x128xf32> to vector<8x32xf32>
    %38 = vector.extract_strided_slice %36 {offsets = [0, 32], sizes = [8, 32], strides = [1, 1]} : vector<8x128xf32> to vector<8x32xf32>
    %39 = vector.extract_strided_slice %36 {offsets = [0, 64], sizes = [8, 32], strides = [1, 1]} : vector<8x128xf32> to vector<8x32xf32>
    %40 = vector.extract_strided_slice %36 {offsets = [0, 96], sizes = [8, 32], strides = [1, 1]} : vector<8x128xf32> to vector<8x32xf32>
    %41 = arith.mulf %38, %25 : vector<8x32xf32>
    %42 = arith.mulf %37, %39 : vector<8x32xf32>
    %43 = arith.addf %41, %42 : vector<8x32xf32>
    %44 = math.tanh %43 : vector<8x32xf32>
    %45 = arith.mulf %40, %44 : vector<8x32xf32>
    %46 = vector.extract_strided_slice %14 {offsets = [1, 0, 0], sizes = [1, 8, 128], strides = [1, 1, 1]} : vector<8x8x128xf32> to vector<1x8x128xf32>
    %47 = vector.shape_cast %46 : vector<1x8x128xf32> to vector<8x128xf32>
    %cst_15 = arith.constant dense<0.000000e+00> : vector<8x128xf32>
    %48 = tpu.matmul %45, %6, %cst_15 {dimension_numbers = #tpu.dot_dimension_numbers<[1], [0], [0], [1], [0, 0, 1, 1], [], []>} : vector<8x32xf32>, vector<32x128xf32>, vector<8x128xf32> -> vector<8x128xf32>
    %49 = arith.addf %47, %48 : vector<8x128xf32>
    %50 = arith.mulf %49, %23 : vector<8x128xf32>
    %51 = math.tanh %50 : vector<8x128xf32>
    %cst_16 = arith.constant 5.000000e-01 : f32
    %52 = vector.broadcast %cst_16 : f32 to vector<8x128xf32>
    %53 = arith.mulf %52, %51 : vector<8x128xf32>
    %cst_17 = arith.constant 5.000000e-01 : f32
    %54 = vector.broadcast %cst_17 : f32 to vector<8x128xf32>
    %55 = arith.addf %53, %54 : vector<8x128xf32>
    %56 = arith.select %20, %51, %55 : vector<8x128xi1>, vector<8x128xf32>
    %57 = vector.extract_strided_slice %56 {offsets = [0, 0], sizes = [8, 32], strides = [1, 1]} : vector<8x128xf32> to vector<8x32xf32>
    %58 = vector.extract_strided_slice %56 {offsets = [0, 32], sizes = [8, 32], strides = [1, 1]} : vector<8x128xf32> to vector<8x32xf32>
    %59 = vector.extract_strided_slice %56 {offsets = [0, 64], sizes = [8, 32], strides = [1, 1]} : vector<8x128xf32> to vector<8x32xf32>
    %60 = vector.extract_strided_slice %56 {offsets = [0, 96], sizes = [8, 32], strides = [1, 1]} : vector<8x128xf32> to vector<8x32xf32>
    %61 = arith.mulf %58, %43 : vector<8x32xf32>
    %62 = arith.mulf %57, %59 : vector<8x32xf32>
    %63 = arith.addf %61, %62 : vector<8x32xf32>
    %64 = math.tanh %63 : vector<8x32xf32>
    %65 = arith.mulf %60, %64 : vector<8x32xf32>
    %66 = vector.extract_strided_slice %14 {offsets = [2, 0, 0], sizes = [1, 8, 128], strides = [1, 1, 1]} : vector<8x8x128xf32> to vector<1x8x128xf32>
    %67 = vector.shape_cast %66 : vector<1x8x128xf32> to vector<8x128xf32>
    %cst_18 = arith.constant dense<0.000000e+00> : vector<8x128xf32>
    %68 = tpu.matmul %65, %6, %cst_18 {dimension_numbers = #tpu.dot_dimension_numbers<[1], [0], [0], [1], [0, 0, 1, 1], [], []>} : vector<8x32xf32>, vector<32x128xf32>, vector<8x128xf32> -> vector<8x128xf32>
    %69 = arith.addf %67, %68 : vector<8x128xf32>
    %70 = arith.mulf %69, %23 : vector<8x128xf32>
    %71 = math.tanh %70 : vector<8x128xf32>
    %cst_19 = arith.constant 5.000000e-01 : f32
    %72 = vector.broadcast %cst_19 : f32 to vector<8x128xf32>
    %73 = arith.mulf %72, %71 : vector<8x128xf32>
    %cst_20 = arith.constant 5.000000e-01 : f32
    %74 = vector.broadcast %cst_20 : f32 to vector<8x128xf32>
    %75 = arith.addf %73, %74 : vector<8x128xf32>
    %76 = arith.select %20, %71, %75 : vector<8x128xi1>, vector<8x128xf32>
    %77 = vector.extract_strided_slice %76 {offsets = [0, 0], sizes = [8, 32], strides = [1, 1]} : vector<8x128xf32> to vector<8x32xf32>
    %78 = vector.extract_strided_slice %76 {offsets = [0, 32], sizes = [8, 32], strides = [1, 1]} : vector<8x128xf32> to vector<8x32xf32>
    %79 = vector.extract_strided_slice %76 {offsets = [0, 64], sizes = [8, 32], strides = [1, 1]} : vector<8x128xf32> to vector<8x32xf32>
    %80 = vector.extract_strided_slice %76 {offsets = [0, 96], sizes = [8, 32], strides = [1, 1]} : vector<8x128xf32> to vector<8x32xf32>
    %81 = arith.mulf %78, %63 : vector<8x32xf32>
    %82 = arith.mulf %77, %79 : vector<8x32xf32>
    %83 = arith.addf %81, %82 : vector<8x32xf32>
    %84 = math.tanh %83 : vector<8x32xf32>
    %85 = arith.mulf %80, %84 : vector<8x32xf32>
    %86 = vector.extract_strided_slice %14 {offsets = [3, 0, 0], sizes = [1, 8, 128], strides = [1, 1, 1]} : vector<8x8x128xf32> to vector<1x8x128xf32>
    %87 = vector.shape_cast %86 : vector<1x8x128xf32> to vector<8x128xf32>
    %cst_21 = arith.constant dense<0.000000e+00> : vector<8x128xf32>
    %88 = tpu.matmul %85, %6, %cst_21 {dimension_numbers = #tpu.dot_dimension_numbers<[1], [0], [0], [1], [0, 0, 1, 1], [], []>} : vector<8x32xf32>, vector<32x128xf32>, vector<8x128xf32> -> vector<8x128xf32>
    %89 = arith.addf %87, %88 : vector<8x128xf32>
    %90 = arith.mulf %89, %23 : vector<8x128xf32>
    %91 = math.tanh %90 : vector<8x128xf32>
    %cst_22 = arith.constant 5.000000e-01 : f32
    %92 = vector.broadcast %cst_22 : f32 to vector<8x128xf32>
    %93 = arith.mulf %92, %91 : vector<8x128xf32>
    %cst_23 = arith.constant 5.000000e-01 : f32
    %94 = vector.broadcast %cst_23 : f32 to vector<8x128xf32>
    %95 = arith.addf %93, %94 : vector<8x128xf32>
    %96 = arith.select %20, %91, %95 : vector<8x128xi1>, vector<8x128xf32>
    %97 = vector.extract_strided_slice %96 {offsets = [0, 0], sizes = [8, 32], strides = [1, 1]} : vector<8x128xf32> to vector<8x32xf32>
    %98 = vector.extract_strided_slice %96 {offsets = [0, 32], sizes = [8, 32], strides = [1, 1]} : vector<8x128xf32> to vector<8x32xf32>
    %99 = vector.extract_strided_slice %96 {offsets = [0, 64], sizes = [8, 32], strides = [1, 1]} : vector<8x128xf32> to vector<8x32xf32>
    %100 = vector.extract_strided_slice %96 {offsets = [0, 96], sizes = [8, 32], strides = [1, 1]} : vector<8x128xf32> to vector<8x32xf32>
    %101 = arith.mulf %98, %83 : vector<8x32xf32>
    %102 = arith.mulf %97, %99 : vector<8x32xf32>
    %103 = arith.addf %101, %102 : vector<8x32xf32>
    %104 = math.tanh %103 : vector<8x32xf32>
    %105 = arith.mulf %100, %104 : vector<8x32xf32>
    %106 = vector.extract_strided_slice %14 {offsets = [4, 0, 0], sizes = [1, 8, 128], strides = [1, 1, 1]} : vector<8x8x128xf32> to vector<1x8x128xf32>
    %107 = vector.shape_cast %106 : vector<1x8x128xf32> to vector<8x128xf32>
    %cst_24 = arith.constant dense<0.000000e+00> : vector<8x128xf32>
    %108 = tpu.matmul %105, %6, %cst_24 {dimension_numbers = #tpu.dot_dimension_numbers<[1], [0], [0], [1], [0, 0, 1, 1], [], []>} : vector<8x32xf32>, vector<32x128xf32>, vector<8x128xf32> -> vector<8x128xf32>
    %109 = arith.addf %107, %108 : vector<8x128xf32>
    %110 = arith.mulf %109, %23 : vector<8x128xf32>
    %111 = math.tanh %110 : vector<8x128xf32>
    %cst_25 = arith.constant 5.000000e-01 : f32
    %112 = vector.broadcast %cst_25 : f32 to vector<8x128xf32>
    %113 = arith.mulf %112, %111 : vector<8x128xf32>
    %cst_26 = arith.constant 5.000000e-01 : f32
    %114 = vector.broadcast %cst_26 : f32 to vector<8x128xf32>
    %115 = arith.addf %113, %114 : vector<8x128xf32>
    %116 = arith.select %20, %111, %115 : vector<8x128xi1>, vector<8x128xf32>
    %117 = vector.extract_strided_slice %116 {offsets = [0, 0], sizes = [8, 32], strides = [1, 1]} : vector<8x128xf32> to vector<8x32xf32>
    %118 = vector.extract_strided_slice %116 {offsets = [0, 32], sizes = [8, 32], strides = [1, 1]} : vector<8x128xf32> to vector<8x32xf32>
    %119 = vector.extract_strided_slice %116 {offsets = [0, 64], sizes = [8, 32], strides = [1, 1]} : vector<8x128xf32> to vector<8x32xf32>
    %120 = vector.extract_strided_slice %116 {offsets = [0, 96], sizes = [8, 32], strides = [1, 1]} : vector<8x128xf32> to vector<8x32xf32>
    %121 = arith.mulf %118, %103 : vector<8x32xf32>
    %122 = arith.mulf %117, %119 : vector<8x32xf32>
    %123 = arith.addf %121, %122 : vector<8x32xf32>
    %124 = math.tanh %123 : vector<8x32xf32>
    %125 = arith.mulf %120, %124 : vector<8x32xf32>
    %126 = vector.extract_strided_slice %14 {offsets = [5, 0, 0], sizes = [1, 8, 128], strides = [1, 1, 1]} : vector<8x8x128xf32> to vector<1x8x128xf32>
    %127 = vector.shape_cast %126 : vector<1x8x128xf32> to vector<8x128xf32>
    %cst_27 = arith.constant dense<0.000000e+00> : vector<8x128xf32>
    %128 = tpu.matmul %125, %6, %cst_27 {dimension_numbers = #tpu.dot_dimension_numbers<[1], [0], [0], [1], [0, 0, 1, 1], [], []>} : vector<8x32xf32>, vector<32x128xf32>, vector<8x128xf32> -> vector<8x128xf32>
    %129 = arith.addf %127, %128 : vector<8x128xf32>
    %130 = arith.mulf %129, %23 : vector<8x128xf32>
    %131 = math.tanh %130 : vector<8x128xf32>
    %cst_28 = arith.constant 5.000000e-01 : f32
    %132 = vector.broadcast %cst_28 : f32 to vector<8x128xf32>
    %133 = arith.mulf %132, %131 : vector<8x128xf32>
    %cst_29 = arith.constant 5.000000e-01 : f32
    %134 = vector.broadcast %cst_29 : f32 to vector<8x128xf32>
    %135 = arith.addf %133, %134 : vector<8x128xf32>
    %136 = arith.select %20, %131, %135 : vector<8x128xi1>, vector<8x128xf32>
    %137 = vector.extract_strided_slice %136 {offsets = [0, 0], sizes = [8, 32], strides = [1, 1]} : vector<8x128xf32> to vector<8x32xf32>
    %138 = vector.extract_strided_slice %136 {offsets = [0, 32], sizes = [8, 32], strides = [1, 1]} : vector<8x128xf32> to vector<8x32xf32>
    %139 = vector.extract_strided_slice %136 {offsets = [0, 64], sizes = [8, 32], strides = [1, 1]} : vector<8x128xf32> to vector<8x32xf32>
    %140 = vector.extract_strided_slice %136 {offsets = [0, 96], sizes = [8, 32], strides = [1, 1]} : vector<8x128xf32> to vector<8x32xf32>
    %141 = arith.mulf %138, %123 : vector<8x32xf32>
    %142 = arith.mulf %137, %139 : vector<8x32xf32>
    %143 = arith.addf %141, %142 : vector<8x32xf32>
    %144 = math.tanh %143 : vector<8x32xf32>
    %145 = arith.mulf %140, %144 : vector<8x32xf32>
    %146 = vector.extract_strided_slice %14 {offsets = [6, 0, 0], sizes = [1, 8, 128], strides = [1, 1, 1]} : vector<8x8x128xf32> to vector<1x8x128xf32>
    %147 = vector.shape_cast %146 : vector<1x8x128xf32> to vector<8x128xf32>
    %cst_30 = arith.constant dense<0.000000e+00> : vector<8x128xf32>
    %148 = tpu.matmul %145, %6, %cst_30 {dimension_numbers = #tpu.dot_dimension_numbers<[1], [0], [0], [1], [0, 0, 1, 1], [], []>} : vector<8x32xf32>, vector<32x128xf32>, vector<8x128xf32> -> vector<8x128xf32>
    %149 = arith.addf %147, %148 : vector<8x128xf32>
    %150 = arith.mulf %149, %23 : vector<8x128xf32>
    %151 = math.tanh %150 : vector<8x128xf32>
    %cst_31 = arith.constant 5.000000e-01 : f32
    %152 = vector.broadcast %cst_31 : f32 to vector<8x128xf32>
    %153 = arith.mulf %152, %151 : vector<8x128xf32>
    %cst_32 = arith.constant 5.000000e-01 : f32
    %154 = vector.broadcast %cst_32 : f32 to vector<8x128xf32>
    %155 = arith.addf %153, %154 : vector<8x128xf32>
    %156 = arith.select %20, %151, %155 : vector<8x128xi1>, vector<8x128xf32>
    %157 = vector.extract_strided_slice %156 {offsets = [0, 0], sizes = [8, 32], strides = [1, 1]} : vector<8x128xf32> to vector<8x32xf32>
    %158 = vector.extract_strided_slice %156 {offsets = [0, 32], sizes = [8, 32], strides = [1, 1]} : vector<8x128xf32> to vector<8x32xf32>
    %159 = vector.extract_strided_slice %156 {offsets = [0, 64], sizes = [8, 32], strides = [1, 1]} : vector<8x128xf32> to vector<8x32xf32>
    %160 = vector.extract_strided_slice %156 {offsets = [0, 96], sizes = [8, 32], strides = [1, 1]} : vector<8x128xf32> to vector<8x32xf32>
    %161 = arith.mulf %158, %143 : vector<8x32xf32>
    %162 = arith.mulf %157, %159 : vector<8x32xf32>
    %163 = arith.addf %161, %162 : vector<8x32xf32>
    %164 = math.tanh %163 : vector<8x32xf32>
    %165 = arith.mulf %160, %164 : vector<8x32xf32>
    %166 = vector.extract_strided_slice %14 {offsets = [7, 0, 0], sizes = [1, 8, 128], strides = [1, 1, 1]} : vector<8x8x128xf32> to vector<1x8x128xf32>
    %167 = vector.shape_cast %166 : vector<1x8x128xf32> to vector<8x128xf32>
    %cst_33 = arith.constant dense<0.000000e+00> : vector<8x128xf32>
    %168 = tpu.matmul %165, %6, %cst_33 {dimension_numbers = #tpu.dot_dimension_numbers<[1], [0], [0], [1], [0, 0, 1, 1], [], []>} : vector<8x32xf32>, vector<32x128xf32>, vector<8x128xf32> -> vector<8x128xf32>
    %169 = arith.addf %167, %168 : vector<8x128xf32>
    %170 = arith.mulf %169, %23 : vector<8x128xf32>
    %171 = math.tanh %170 : vector<8x128xf32>
    %cst_34 = arith.constant 5.000000e-01 : f32
    %172 = vector.broadcast %cst_34 : f32 to vector<8x128xf32>
    %173 = arith.mulf %172, %171 : vector<8x128xf32>
    %cst_35 = arith.constant 5.000000e-01 : f32
    %174 = vector.broadcast %cst_35 : f32 to vector<8x128xf32>
    %175 = arith.addf %173, %174 : vector<8x128xf32>
    %176 = arith.select %20, %171, %175 : vector<8x128xi1>, vector<8x128xf32>
    %177 = vector.extract_strided_slice %176 {offsets = [0, 0], sizes = [8, 32], strides = [1, 1]} : vector<8x128xf32> to vector<8x32xf32>
    %178 = vector.extract_strided_slice %176 {offsets = [0, 32], sizes = [8, 32], strides = [1, 1]} : vector<8x128xf32> to vector<8x32xf32>
    %179 = vector.extract_strided_slice %176 {offsets = [0, 64], sizes = [8, 32], strides = [1, 1]} : vector<8x128xf32> to vector<8x32xf32>
    %180 = vector.extract_strided_slice %176 {offsets = [0, 96], sizes = [8, 32], strides = [1, 1]} : vector<8x128xf32> to vector<8x32xf32>
    %181 = arith.mulf %178, %163 : vector<8x32xf32>
    %182 = arith.mulf %177, %179 : vector<8x32xf32>
    %183 = arith.addf %181, %182 : vector<8x32xf32>
    %184 = math.tanh %183 : vector<8x32xf32>
    %185 = arith.mulf %180, %184 : vector<8x32xf32>
    %c0_36 = arith.constant 0 : index
    %c0_37 = arith.constant 0 : index
    %186 = vector.load %arg4[%c0_36, %c0_37] : memref<32x256xf32, #tpu.memory_space<vmem>>, vector<32x256xf32>
    %cst_38 = arith.constant dense<0.000000e+00> : vector<8x256xf32>
    %187 = tpu.matmul %185, %186, %cst_38 {dimension_numbers = #tpu.dot_dimension_numbers<[1], [0], [0], [1], [0, 0, 1, 1], [], []>} : vector<8x32xf32>, vector<32x256xf32>, vector<8x256xf32> -> vector<8x256xf32>
    %c0_39 = arith.constant 0 : index
    %c0_40 = arith.constant 0 : index
    %188 = vector.load %arg5[%c0_39, %c0_40] : memref<1x256xf32, #tpu.memory_space<vmem>>, vector<1x256xf32>
    %189 = vector.broadcast %188 : vector<1x256xf32> to vector<8x256xf32>
    %190 = arith.addf %187, %189 : vector<8x256xf32>
    %191 = arith.mulf %190, %190 : vector<8x256xf32>
    %cst_41 = arith.constant dense<0.000000e+00> : vector<8xf32>
    %192 = vector.multi_reduction <add>, %191, %cst_41 [1] : vector<8x256xf32> to vector<8xf32>
    %193 = vector.shape_cast %192 : vector<8xf32> to vector<8x1xf32>
    %194 = math.rsqrt %193 : vector<8x1xf32>
    %cst_42 = arith.constant 3.1622777 : f32
    %195 = vector.broadcast %cst_42 : f32 to vector<8x1xf32>
    %196 = arith.mulf %195, %194 : vector<8x1xf32>
    %197 = vector.broadcast %196 : vector<8x1xf32> to vector<8x256xf32>
    %198 = arith.mulf %190, %197 : vector<8x256xf32>
    %c0_i32_43 = arith.constant 0 : i32
    %199 = tpu.memref_slice %arg16[%c0_i32_43] : memref<3x!tpu.dma_semaphore, #tpu.memory_space<semaphore_mem>> -> memref<1x!tpu.dma_semaphore, #tpu.memory_space<semaphore_mem>>
    %200 = tpu.memref_squeeze %199 : memref<1x!tpu.dma_semaphore, #tpu.memory_space<semaphore_mem>> -> memref<!tpu.dma_semaphore, #tpu.memory_space<semaphore_mem>>
    tpu.wait_dma2 semaphore(%200 : memref<!tpu.dma_semaphore, #tpu.memory_space<semaphore_mem>>) src(%arg6 : memref<256x64xf32, #tpu.memory_space<any>>) dst(%arg13 : memref<256x64xf32, #tpu.memory_space<vmem>>)
    %c0_44 = arith.constant 0 : index
    %c0_45 = arith.constant 0 : index
    %201 = vector.load %arg13[%c0_44, %c0_45] : memref<256x64xf32, #tpu.memory_space<vmem>>, vector<256x64xf32>
    %cst_46 = arith.constant dense<0.000000e+00> : vector<8x64xf32>
    %202 = tpu.matmul %198, %201, %cst_46 {dimension_numbers = #tpu.dot_dimension_numbers<[1], [0], [0], [1], [0, 0, 1, 1], [], []>} : vector<8x256xf32>, vector<256x64xf32>, vector<8x64xf32> -> vector<8x64xf32>
    %c0_47 = arith.constant 0 : index
    %c0_48 = arith.constant 0 : index
    %203 = vector.load %arg7[%c0_47, %c0_48] : memref<1x64xf32, #tpu.memory_space<vmem>>, vector<1x64xf32>
    %204 = vector.broadcast %203 : vector<1x64xf32> to vector<8x64xf32>
    %205 = arith.addf %202, %204 : vector<8x64xf32>
    %cst_49 = arith.constant 0.000000e+00 : f32
    %206 = vector.broadcast %cst_49 : f32 to vector<8x64xf32>
    %207 = arith.maximumf %205, %206 : vector<8x64xf32>
    %c1_i32_50 = arith.constant 1 : i32
    %208 = tpu.memref_slice %arg16[%c1_i32_50] : memref<3x!tpu.dma_semaphore, #tpu.memory_space<semaphore_mem>> -> memref<1x!tpu.dma_semaphore, #tpu.memory_space<semaphore_mem>>
    %209 = tpu.memref_squeeze %208 : memref<1x!tpu.dma_semaphore, #tpu.memory_space<semaphore_mem>> -> memref<!tpu.dma_semaphore, #tpu.memory_space<semaphore_mem>>
    tpu.wait_dma2 semaphore(%209 : memref<!tpu.dma_semaphore, #tpu.memory_space<semaphore_mem>>) src(%arg8 : memref<64x256xf32, #tpu.memory_space<any>>) dst(%arg14 : memref<64x256xf32, #tpu.memory_space<vmem>>)
    %c0_51 = arith.constant 0 : index
    %c0_52 = arith.constant 0 : index
    %210 = vector.load %arg14[%c0_51, %c0_52] : memref<64x256xf32, #tpu.memory_space<vmem>>, vector<64x256xf32>
    %cst_53 = arith.constant dense<0.000000e+00> : vector<8x256xf32>
    %211 = tpu.matmul %207, %210, %cst_53 {dimension_numbers = #tpu.dot_dimension_numbers<[1], [0], [0], [1], [0, 0, 1, 1], [], []>} : vector<8x64xf32>, vector<64x256xf32>, vector<8x256xf32> -> vector<8x256xf32>
    %c0_54 = arith.constant 0 : index
    %c0_55 = arith.constant 0 : index
    %212 = vector.load %arg9[%c0_54, %c0_55] : memref<1x256xf32, #tpu.memory_space<vmem>>, vector<1x256xf32>
    %213 = vector.broadcast %212 : vector<1x256xf32> to vector<8x256xf32>
    %214 = arith.addf %211, %213 : vector<8x256xf32>
    %c2_i32_56 = arith.constant 2 : i32
    %215 = tpu.memref_slice %arg16[%c2_i32_56] : memref<3x!tpu.dma_semaphore, #tpu.memory_space<semaphore_mem>> -> memref<1x!tpu.dma_semaphore, #tpu.memory_space<semaphore_mem>>
    %216 = tpu.memref_squeeze %215 : memref<1x!tpu.dma_semaphore, #tpu.memory_space<semaphore_mem>> -> memref<!tpu.dma_semaphore, #tpu.memory_space<semaphore_mem>>
    tpu.wait_dma2 semaphore(%216 : memref<!tpu.dma_semaphore, #tpu.memory_space<semaphore_mem>>) src(%arg10 : memref<256x256xf32, #tpu.memory_space<any>>) dst(%arg15 : memref<256x256xf32, #tpu.memory_space<vmem>>)
    %c0_57 = arith.constant 0 : index
    %c0_58 = arith.constant 0 : index
    %217 = vector.load %arg15[%c0_57, %c0_58] : memref<256x256xf32, #tpu.memory_space<vmem>>, vector<256x256xf32>
    %cst_59 = arith.constant dense<0.000000e+00> : vector<8x256xf32>
    %218 = tpu.matmul %214, %217, %cst_59 {dimension_numbers = #tpu.dot_dimension_numbers<[1], [0], [0], [1], [0, 0, 1, 1], [], []>} : vector<8x256xf32>, vector<256x256xf32>, vector<8x256xf32> -> vector<8x256xf32>
    %c0_60 = arith.constant 0 : index
    %c0_61 = arith.constant 0 : index
    %219 = vector.load %arg11[%c0_60, %c0_61] : memref<1x256xf32, #tpu.memory_space<vmem>>, vector<1x256xf32>
    %220 = vector.broadcast %219 : vector<1x256xf32> to vector<8x256xf32>
    %221 = arith.addf %218, %220 : vector<8x256xf32>
    %222 = math.tanh %221 : vector<8x256xf32>
    %c0_62 = arith.constant 0 : index
    %c0_63 = arith.constant 0 : index
    %223 = vector.load %arg12[%c0_62, %c0_63] : memref<8x256xf32, #tpu.memory_space<vmem>>, vector<8x256xf32>
    tpu.vector_store %arg12[%c0_62, %c0_63], %222 {strides = array<i32>} : memref<8x256xf32, #tpu.memory_space<vmem>>, vector<8x256xf32>,
    return
  }
}

</mosaic_0001>

<llo_original>
// kernel: tpu_custom_call.1
$region0: #{tpu_custom_call.1}
  #allocation0 [shape = 'u32[]', space=smem, size = 0x4, offset = 0x4, fixed_abs, tag = 'smem constant byte address 0x4 - core index']
  #allocation1 [shape = 'u32[144,128]{1,0:T(1,128)}', space=vmem, size = 0x12000, scoped, tag = 'internal scratch']
  #allocation2 [shape = 'f32[256,64]{1,0:T(8,128)}', space=vmem, size = 0x20000, scoped, tag = 'scratch operand']
  #allocation3 [shape = 'f32[64,256]{1,0:T(8,128)}', space=vmem, size = 0x10000, scoped, tag = 'scratch operand']
  #allocation4 [shape = 'f32[256,256]{1,0:T(8,128)}', space=vmem, size = 0x40000, scoped, tag = 'scratch operand']
  #allocation5 [shape = 's32[3]{0}', space=sflag, size = 0xc, scoped, tag = 'scratch operand']
  #allocation12 [shape = 's32[]', space=sflag, size = 0x4, offset = 0, fixed_abs, tag = 'sflag constant byte address 0x0 - dummy sync flag']
  #allocation13 [shape = 's32[]', space=sflag, size = 0x4, offset = 0, fixed_abs, tag = 'sflag constant byte address 0x0 - dummy sync flag']
  #allocation14 [shape = 's32[]', space=sflag, size = 0x4, offset = 0, fixed_abs, tag = 'sflag constant byte address 0x0 - dummy sync flag']
  #allocation15 [shape = 'u32[]', space=smem, size = 0x4, offset = 0x44, fixed_abs, tag = 'smem constant byte address 0x44 - assertion arg 0']
  #allocation16 [shape = 'u32[]', space=smem, size = 0x4, offset = 0x48, fixed_abs, tag = 'smem constant byte address 0x48 - assertion arg 1']
  #allocation17 [shape = 's32[]', space=sflag, size = 0x4, offset = 0, fixed_abs, tag = 'sflag constant byte address 0x0 - dummy sync flag']
  #allocation18 [shape = 's32[]', space=sflag, size = 0x4, offset = 0, fixed_abs, tag = 'sflag constant byte address 0x0 - dummy sync flag']
  %s0 = inlined_call_operand.vmem [shape: f32[8,8,256], index: 0, kind: input, shape index: {}]
  %s1 = inlined_call_operand.vmem [shape: f32[256,128], index: 1, kind: input, shape index: {}]
  %s2 = inlined_call_operand.hbm [shape: f32[32,128], index: 2, kind: input, shape index: {}]
  %s3 = inlined_call_operand.vmem [shape: f32[1,128], index: 3, kind: input, shape index: {}]
  %s4 = inlined_call_operand.hbm [shape: f32[32,256], index: 4, kind: input, shape index: {}]
  %s5 = inlined_call_operand.vmem [shape: f32[1,256], index: 5, kind: input, shape index: {}]
  %s6 = inlined_call_operand.vmem [shape: f32[256,64], index: 6, kind: input, shape index: {}]
  %s7 = inlined_call_operand.vmem [shape: f32[1,64], index: 7, kind: input, shape index: {}]
  %s8 = inlined_call_operand.hbm [shape: f32[64,256], index: 8, kind: input, shape index: {}]
  %s9 = inlined_call_operand.vmem [shape: f32[1,256], index: 9, kind: input, shape index: {}]
  %s10 = inlined_call_operand.hbm [shape: f32[256,256], index: 10, kind: input, shape index: {}]
  %s11 = inlined_call_operand.vmem [shape: f32[1,256], index: 11, kind: input, shape index: {}]
  %s12 = inlined_call_operand.hbm [shape: f32[8,256], index: 12, kind: output, shape index: {}]
  %s13 = sld [smem:[#allocation0]]
  $region96: #{tpu_custom_call.1} parent=0
    _
  %s15 = ssub.s32 1, %s13
  %s16 = scalar_select 0, %s15, %s13
  $region1: #{tpu_custom_call.1} parent=0
    #allocation6 [shape = 'u8[16384]{0}', space=vmem, size = 0x4000, scoped, tag = 'input window, operand 2, single buffered']
    #allocation7 [shape = 's32[1]{0}', space=sflag, size = 0x4, scoped, tag = 'scoped memory for tpu_custom_call.1']
    #allocation8 [shape = 's32[1]{0}', space=sflag, size = 0x4, scoped, tag = 'scoped memory for tpu_custom_call.1']
    #allocation9 [shape = 'u8[32768]{0}', space=vmem, size = 0x8000, scoped, tag = 'input window, operand 4, single buffered']
    #allocation10 [shape = 's32[1]{0}', space=sflag, size = 0x4, scoped, tag = 'scoped memory for tpu_custom_call.1']
    #allocation11 [shape = 'u8[8192]{0}', space=vmem, size = 0x2000, scoped, tag = 'output window, operand 0, single buffered']
    %17 = vsyncpa [#allocation7], 0
    %18 = vsyncpa [#allocation10], 0
    %19 = vsyncpa [#allocation8], 0
    // Predicated region
    $region2: #{tpu_custom_call.1} parent=1 // pred_check
      _
    $region3: #{tpu_custom_call.1} parent=1 // pred_check_branch
      %21 = sbr.rel (0) target = $region5
    $region4: #{tpu_custom_call.1} parent=1 // pred_region
      _
    $region5: #{tpu_custom_call.1} parent=1 // pred_fallthru
      _
    // Predicated region
    $region6: #{tpu_custom_call.1} parent=1 // pred_check
      _
    $region7: #{tpu_custom_call.1} parent=1 // pred_check_branch
      %23 = sbr.rel (0) target = $region9
    $region8: #{tpu_custom_call.1} parent=1 // pred_region
      _
    $region9: #{tpu_custom_call.1} parent=1 // pred_fallthru
      _
    // Predicated region
    $region10: #{tpu_custom_call.1} parent=1 // pred_check
      _
    $region11: #{tpu_custom_call.1} parent=1 // pred_check_branch
      %25 = sbr.rel (0) target = $region13
    $region12: #{tpu_custom_call.1} parent=1 // pred_region
      %s27 = ssub.s32 512, 512
      %28 = vsyncadd [#allocation7], %s27
      %s29 = sshll.u32 [#allocation6], 4
      %s30 = int_to_ptr.vmem [resolvable:$true] %s29
      %35 = dma.hbm_to_vmem [thread:$0]  %s2, 512, %s30, [#allocation7], 128, 128, 8
    $region13: #{tpu_custom_call.1} parent=1 // pred_fallthru
      _
    // Predicated region
    $region14: #{tpu_custom_call.1} parent=1 // pred_check
      _
    $region15: #{tpu_custom_call.1} parent=1 // pred_check_branch
      %37 = sbr.rel (0) target = $region17
    $region16: #{tpu_custom_call.1} parent=1 // pred_region
      _
    $region17: #{tpu_custom_call.1} parent=1 // pred_fallthru
      _
    // Predicated region
    $region18: #{tpu_custom_call.1} parent=1 // pred_check
      _
    $region19: #{tpu_custom_call.1} parent=1 // pred_check_branch
      %39 = sbr.rel (0) target = $region21
    $region20: #{tpu_custom_call.1} parent=1 // pred_region
      %s41 = ssub.s32 1024, 1024
      %42 = vsyncadd [#allocation10], %s41
      %s43 = sshll.u32 [#allocation9], 4
      %s44 = int_to_ptr.vmem [resolvable:$true] %s43
      %49 = dma.hbm_to_vmem [thread:$0]  %s4, 1024, %s44, [#allocation10], 256, 256, 16
    $region21: #{tpu_custom_call.1} parent=1 // pred_fallthru
      _
    // Predicated region
    $region22: #{tpu_custom_call.1} parent=1 // pred_check
      _
    $region23: #{tpu_custom_call.1} parent=1 // pred_check_branch
      %51 = sbr.rel (0) target = $region25
    $region24: #{tpu_custom_call.1} parent=1 // pred_region
      _
    $region25: #{tpu_custom_call.1} parent=1 // pred_fallthru
      _
    // Predicated region
    $region26: #{tpu_custom_call.1} parent=1 // pred_check
      _
    $region27: #{tpu_custom_call.1} parent=1 // pred_check_branch
      %53 = sbr.rel (0) target = $region29
    $region28: #{tpu_custom_call.1} parent=1 // pred_region
      _
    $region29: #{tpu_custom_call.1} parent=1 // pred_fallthru
      _
    // Predicated region
    $region30: #{tpu_custom_call.1} parent=1 // pred_check
      _
    $region31: #{tpu_custom_call.1} parent=1 // pred_check_branch
      %55 = sbr.rel (0) target = $region33
    $region32: #{tpu_custom_call.1} parent=1 // pred_region
      _
    $region33: #{tpu_custom_call.1} parent=1 // pred_fallthru
      _
    // Predicated region
    $region34: #{tpu_custom_call.1} parent=1 // pred_check
      _
    $region35: #{tpu_custom_call.1} parent=1 // pred_check_branch
      %57 = sbr.rel (0) target = $region37
    $region36: #{tpu_custom_call.1} parent=1 // pred_region
      _
    $region37: #{tpu_custom_call.1} parent=1 // pred_fallthru
      _
    // Predicated region
    $region38: #{tpu_custom_call.1} parent=1 // pred_check
      _
    $region39: #{tpu_custom_call.1} parent=1 // pred_check_branch
      %59 = sbr.rel (0) target = $region41
    $region40: #{tpu_custom_call.1} parent=1 // pred_region
      %60 = dma.done [#allocation7], 512
    $region41: #{tpu_custom_call.1} parent=1 // pred_fallthru
      _
    // Predicated region
    $region42: #{tpu_custom_call.1} parent=1 // pred_check
      _
    $region43: #{tpu_custom_call.1} parent=1 // pred_check_branch
      %62 = sbr.rel (0) target = $region45
    $region44: #{tpu_custom_call.1} parent=1 // pred_region
      %63 = dma.done [#allocation10], 1024
    $region45: #{tpu_custom_call.1} parent=1 // pred_fallthru
      _
    %p65 = scmp.lt.u32.totalorder 256, 8
    %p66 = pneg %p65
    // Predicated region
    $region46: #{tpu_custom_call.1} parent=1 // pred_check
      _
    $region47: #{tpu_custom_call.1} parent=1 // pred_check_branch
      %68 = sbr.rel (%p65) target = $region49
    $region48: #{tpu_custom_call.1} parent=1 // pred_region
      %s84 = sand.u32 256, 7
      %p85 = scmp.eq.s32.totalorder %s84, 0
      // Predicated region
      $region61: #{tpu_custom_call.1} parent=48 // pred_check
        %p86 = pneg %p85
      $region62: #{tpu_custom_call.1} parent=48 // pred_check_branch
        %88 = sbr.rel (%p86) target = $region64
      $region63: #{tpu_custom_call.1} parent=48 // pred_region
        loop: start=0, step=1, limit=1
        $region65: #{tpu_custom_call.1} parent=63 // loop_pre_header
          _
        $region66: #{tpu_custom_call.1} parent=63 // loop_header
          %s90 = sphi 0, %s94
          %p91 = scmp.ge.s32.totalorder %s90, 1
          %s95 = sphi %s6, %s6
          %s96 = sphi [#allocation2], [#allocation2]
        $region67: #{tpu_custom_call.1} parent=63 // loop_header_branch
          %93 = sbr.rel (%p91) target = $region71
        $region68: #{tpu_custom_call.1} parent=63 // loop_body
          %v97 = vld [vmem:[%s95] sm:$0xff]
          %98 = vst [vmem:[%s96] sm:$0xff] %v97
          %v99 = vld [vmem:[%s95 + $0x8] sm:$0xff]
          %100 = vst [vmem:[%s96 + $0x8] sm:$0xff] %v99
          %v101 = vld [vmem:[%s95 + $0x10] sm:$0xff]
          %102 = vst [vmem:[%s96 + $0x10] sm:$0xff] %v101
          %v103 = vld [vmem:[%s95 + $0x18] sm:$0xff]
          %104 = vst [vmem:[%s96 + $0x18] sm:$0xff] %v103
          %v105 = vld [vmem:[%s95 + $0x20] sm:$0xff]
          %106 = vst [vmem:[%s96 + $0x20] sm:$0xff] %v105
          %v107 = vld [vmem:[%s95 + $0x28] sm:$0xff]
          %108 = vst [vmem:[%s96 + $0x28] sm:$0xff] %v107
          %v109 = vld [vmem:[%s95 + $0x30] sm:$0xff]
          %110 = vst [vmem:[%s96 + $0x30] sm:$0xff] %v109
          %v111 = vld [vmem:[%s95 + $0x38] sm:$0xff]
          %112 = vst [vmem:[%s96 + $0x38] sm:$0xff] %v111
          %v113 = vld [vmem:[%s95 + $0x40] sm:$0xff]
          %114 = vst [vmem:[%s96 + $0x40] sm:$0xff] %v113
          %v115 = vld [vmem:[%s95 + $0x48] sm:$0xff]
          %116 = vst [vmem:[%s96 + $0x48] sm:$0xff] %v115
          %v117 = vld [vmem:[%s95 + $0x50] sm:$0xff]
          %118 = vst [vmem:[%s96 + $0x50] sm:$0xff] %v117
          %v119 = vld [vmem:[%s95 + $0x58] sm:$0xff]
          %120 = vst [vmem:[%s96 + $0x58] sm:$0xff] %v119
          %v121 = vld [vmem:[%s95 + $0x60] sm:$0xff]
          %122 = vst [vmem:[%s96 + $0x60] sm:$0xff] %v121
          %v123 = vld [vmem:[%s95 + $0x68] sm:$0xff]
          %124 = vst [vmem:[%s96 + $0x68] sm:$0xff] %v123
          %v125 = vld [vmem:[%s95 + $0x70] sm:$0xff]
          %126 = vst [vmem:[%s96 + $0x70] sm:$0xff] %v125
          %v127 = vld [vmem:[%s95 + $0x78] sm:$0xff]
          %128 = vst [vmem:[%s96 + $0x78] sm:$0xff] %v127
          %v129 = vld [vmem:[%s95 + $0x80] sm:$0xff]
          %130 = vst [vmem:[%s96 + $0x80] sm:$0xff] %v129
          %v131 = vld [vmem:[%s95 + $0x88] sm:$0xff]
          %132 = vst [vmem:[%s96 + $0x88] sm:$0xff] %v131
          %v133 = vld [vmem:[%s95 + $0x90] sm:$0xff]
          %134 = vst [vmem:[%s96 + $0x90] sm:$0xff] %v133
          %v135 = vld [vmem:[%s95 + $0x98] sm:$0xff]
          %136 = vst [vmem:[%s96 + $0x98] sm:$0xff] %v135
          %v137 = vld [vmem:[%s95 + $0xa0] sm:$0xff]
          %138 = vst [vmem:[%s96 + $0xa0] sm:$0xff] %v137
          %v139 = vld [vmem:[%s95 + $0xa8] sm:$0xff]
          %140 = vst [vmem:[%s96 + $0xa8] sm:$0xff] %v139
          %v141 = vld [vmem:[%s95 + $0xb0] sm:$0xff]
          %142 = vst [vmem:[%s96 + $0xb0] sm:$0xff] %v141
          %v143 = vld [vmem:[%s95 + $0xb8] sm:$0xff]
          %144 = vst [vmem:[%s96 + $0xb8] sm:$0xff] %v143
          %v145 = vld [vmem:[%s95 + $0xc0] sm:$0xff]
          %146 = vst [vmem:[%s96 + $0xc0] sm:$0xff] %v145
          %v147 = vld [vmem:[%s95 + $0xc8] sm:$0xff]
          %148 = vst [vmem:[%s96 + $0xc8] sm:$0xff] %v147
          %v149 = vld [vmem:[%s95 + $0xd0] sm:$0xff]
          %150 = vst [vmem:[%s96 + $0xd0] sm:$0xff] %v149
          %v151 = vld [vmem:[%s95 + $0xd8] sm:$0xff]
          %152 = vst [vmem:[%s96 + $0xd8] sm:$0xff] %v151
          %v153 = vld [vmem:[%s95 + $0xe0] sm:$0xff]
          %154 = vst [vmem:[%s96 + $0xe0] sm:$0xff] %v153
          %v155 = vld [vmem:[%s95 + $0xe8] sm:$0xff]
          %156 = vst [vmem:[%s96 + $0xe8] sm:$0xff] %v155
          %v157 = vld [vmem:[%s95 + $0xf0] sm:$0xff]
          %158 = vst [vmem:[%s96 + $0xf0] sm:$0xff] %v157
          %v159 = vld [vmem:[%s95 + $0xf8] sm:$0xff]
          %160 = vst [vmem:[%s96 + $0xf8] sm:$0xff] %v159
        $region69: #{tpu_custom_call.1} parent=63 // loop_footer
          %s94 = sadd.s32 1, %s90
        $region70: #{tpu_custom_call.1} parent=63 // loop_footer_branch
          %89 = sbr.rel target = $region66
        $region71: #{tpu_custom_call.1} parent=63 // loop_exit
          _
      $region64: #{tpu_custom_call.1} parent=48 // pred_fallthru
        _
      %p161 = pneg %p85
      // Predicated region
      $region72: #{tpu_custom_call.1} parent=48 // pred_check
        _
      $region73: #{tpu_custom_call.1} parent=48 // pred_check_branch
        %163 = sbr.rel (%p85) target = $region75
      $region74: #{tpu_custom_call.1} parent=48 // pred_region
        %s164 = sand.u32 256, 7
      $region75: #{tpu_custom_call.1} parent=48 // pred_fallthru
        _
    $region49: #{tpu_custom_call.1} parent=1 // pred_fallthru
      _
    // Predicated region
    $region50: #{tpu_custom_call.1} parent=1 // pred_check
      %p69 = pneg %p65
    $region51: #{tpu_custom_call.1} parent=1 // pred_check_branch
      %71 = sbr.rel (%p69) target = $region53
    $region52: #{tpu_custom_call.1} parent=1 // pred_region
      %s72 = sshll.u32 1, 256
      %s73 = ssub.s32 %s72, 1
      loop: start=0, step=1, limit=1
      $region54: #{tpu_custom_call.1} parent=52 // loop_pre_header
        _
      $region55: #{tpu_custom_call.1} parent=52 // loop_header
        %s75 = sphi 0, %s79
        %p76 = scmp.ge.s32.totalorder %s75, 1
        %s80 = sphi %s6, %s6
        %s81 = sphi [#allocation2], [#allocation2]
      $region56: #{tpu_custom_call.1} parent=52 // loop_header_branch
        %78 = sbr.rel (%p76) target = $region60
      $region57: #{tpu_custom_call.1} parent=52 // loop_body
        %v82 = vld [vmem:[%s80] sm:%s73]
        %83 = vst [vmem:[%s81] sm:%s73] %v82
      $region58: #{tpu_custom_call.1} parent=52 // loop_footer
        %s79 = sadd.s32 1, %s75
      $region59: #{tpu_custom_call.1} parent=52 // loop_footer_branch
        %74 = sbr.rel target = $region55
      $region60: #{tpu_custom_call.1} parent=52 // loop_exit
        _
    $region53: #{tpu_custom_call.1} parent=1 // pred_fallthru
      _
    // Predicated region
    $region76: #{tpu_custom_call.1} parent=1 // pred_check
      _
    $region77: #{tpu_custom_call.1} parent=1 // pred_check_branch
      %167 = sbr.rel (0) target = $region79
    $region78: #{tpu_custom_call.1} parent=1 // pred_region
      %168 = vsyncadd [#allocation5], 4096
    $region79: #{tpu_custom_call.1} parent=1 // pred_fallthru
      _
    %s169 = scalar_lea.sflag [#allocation5], 1
    // Predicated region
    $region80: #{tpu_custom_call.1} parent=1 // pred_check
      _
    $region81: #{tpu_custom_call.1} parent=1 // pred_check_branch
      %171 = sbr.rel target = $region83
    $region82: #{tpu_custom_call.1} parent=1 // pred_region
      %172 = sst [smem:[#allocation15]] [#allocation14]
      %173 = sst [smem:[#allocation16]] [#allocation13]
    $region83: #{tpu_custom_call.1} parent=1 // pred_fallthru
      _
    %175 = shalt.err (0)
    %s177 = sshll.u32 [#allocation3], 4
    %s178 = int_to_ptr.vmem [resolvable:$true] %s177
    %180 = dma.hbm_to_vmem [thread:$0]  %s8, 2048, %s178, %s169
    %s181 = scalar_lea.sflag [#allocation5], 2
    // Predicated region
    $region84: #{tpu_custom_call.1} parent=1 // pred_check
      _
    $region85: #{tpu_custom_call.1} parent=1 // pred_check_branch
      %183 = sbr.rel target = $region87
    $region86: #{tpu_custom_call.1} parent=1 // pred_region
      %184 = sst [smem:[#allocation15]] [#allocation18]
      %185 = sst [smem:[#allocation16]] [#allocation17]
    $region87: #{tpu_custom_call.1} parent=1 // pred_fallthru
      _
    %187 = shalt.err (0)
    %s189 = sshll.u32 [#allocation4], 4
    %s190 = int_to_ptr.vmem [resolvable:$true] %s189
    %192 = dma.hbm_to_vmem [thread:$0]  %s10, 8192, %s190, %s181
    %v193 = vld [vmem:[#allocation6] sm:$0xff]
    %v194 = vld [vmem:[#allocation6 + $0x8] sm:$0xff]
    %v195 = vld [vmem:[#allocation6 + $0x10] sm:$0xff]
    %v196 = vld [vmem:[#allocation6 + $0x18] sm:$0xff]
    %v197 = vld [vmem:[%s0] sm:$0xff]
    %v198 = vld [vmem:[%s0 + $0x8] sm:$0xff]
    %v199 = vld [vmem:[%s0 + $0x10] sm:$0xff]
    %v200 = vld [vmem:[%s0 + $0x18] sm:$0xff]
    %v201 = vld [vmem:[%s0 + $0x20] sm:$0xff]
    %v202 = vld [vmem:[%s0 + $0x28] sm:$0xff]
    %v203 = vld [vmem:[%s0 + $0x30] sm:$0xff]
    %v204 = vld [vmem:[%s0 + $0x38] sm:$0xff]
    %v205 = vld [vmem:[%s0 + $0x40] sm:$0xff]
    %v206 = vld [vmem:[%s0 + $0x48] sm:$0xff]
    %v207 = vld [vmem:[%s0 + $0x50] sm:$0xff]
    %v208 = vld [vmem:[%s0 + $0x58] sm:$0xff]
    %v209 = vld [vmem:[%s0 + $0x60] sm:$0xff]
    %v210 = vld [vmem:[%s0 + $0x68] sm:$0xff]
    %v211 = vld [vmem:[%s0 + $0x70] sm:$0xff]
    %v212 = vld [vmem:[%s0 + $0x78] sm:$0xff]
    %v213 = vld [vmem:[%s1] sm:$0xff]
    %v214 = vld [vmem:[%s1 + $0x8] sm:$0xff]
    %v215 = vld [vmem:[%s1 + $0x10] sm:$0xff]
    %v216 = vld [vmem:[%s1 + $0x18] sm:$0xff]
    %v217 = vld [vmem:[%s1 + $0x20] sm:$0xff]
    %v218 = vld [vmem:[%s1 + $0x28] sm:$0xff]
    %v219 = vld [vmem:[%s1 + $0x30] sm:$0xff]
    %v220 = vld [vmem:[%s1 + $0x38] sm:$0xff]
    %v221 = vld [vmem:[%s1 + $0x40] sm:$0xff]
    %v222 = vld [vmem:[%s1 + $0x48] sm:$0xff]
    %v223 = vld [vmem:[%s1 + $0x50] sm:$0xff]
    %v224 = vld [vmem:[%s1 + $0x58] sm:$0xff]
    %v225 = vld [vmem:[%s1 + $0x60] sm:$0xff]
    %v226 = vld [vmem:[%s1 + $0x68] sm:$0xff]
    %v227 = vld [vmem:[%s1 + $0x70] sm:$0xff]
    %v228 = vld [vmem:[%s1 + $0x78] sm:$0xff]
    %v229 = vld [vmem:[%s1 + $0x80] sm:$0xff]
    %v230 = vld [vmem:[%s1 + $0x88] sm:$0xff]
    %v231 = vld [vmem:[%s1 + $0x90] sm:$0xff]
    %v232 = vld [vmem:[%s1 + $0x98] sm:$0xff]
    %v233 = vld [vmem:[%s1 + $0xa0] sm:$0xff]
    %v234 = vld [vmem:[%s1 + $0xa8] sm:$0xff]
    %v235 = vld [vmem:[%s1 + $0xb0] sm:$0xff]
    %v236 = vld [vmem:[%s1 + $0xb8] sm:$0xff]
    %v237 = vld [vmem:[%s1 + $0xc0] sm:$0xff]
    %v238 = vld [vmem:[%s1 + $0xc8] sm:$0xff]
    %v239 = vld [vmem:[%s1 + $0xd0] sm:$0xff]
    %v240 = vld [vmem:[%s1 + $0xd8] sm:$0xff]
    %v241 = vld [vmem:[%s1 + $0xe0] sm:$0xff]
    %v242 = vld [vmem:[%s1 + $0xe8] sm:$0xff]
    %v243 = vld [vmem:[%s1 + $0xf0] sm:$0xff]
    %v244 = vld [vmem:[%s1 + $0xf8] sm:$0xff]
    %v245 = vld [vmem:[%s3] sm:$0x1]
    %v247 = vlaneseq
    %v248 = vshrl.u32 %v247, 7
    %v249 = vsub.s32 0, %v248
    %v250 = vrot.slane %v245, %v249
    %252 = vmatprep.subr.mxu0 0.0
    %253 = vmatpush1.msra.mxu0 %v228
    %254 = vmatprep.subr.mxu0 0.0
    %255 = vmatpush1.msra.mxu0 %v227
    %256 = vmatprep.subr.mxu0 0.0
    %257 = vmatpush1.msra.mxu0 %v226
    %258 = vmatprep.subr.mxu0 0.0
    %259 = vmatpush1.msra.mxu0 %v225
    %260 = vmatprep.subr.mxu0 0.0
    %261 = vmatpush1.msra.mxu0 %v224
    %262 = vmatprep.subr.mxu0 0.0
    %263 = vmatpush1.msra.mxu0 %v223
    %264 = vmatprep.subr.mxu0 0.0
    %265 = vmatpush1.msra.mxu0 %v222
    %266 = vmatprep.subr.mxu0 0.0
    %267 = vmatpush1.msra.mxu0 %v221
    %268 = vmatprep.subr.mxu0 0.0
    %269 = vmatpush1.msra.mxu0 %v220
    %270 = vmatprep.subr.mxu0 0.0
    %271 = vmatpush1.msra.mxu0 %v219
    %272 = vmatprep.subr.mxu0 0.0
    %273 = vmatpush1.msra.mxu0 %v218
    %274 = vmatprep.subr.mxu0 0.0
    %275 = vmatpush1.msra.mxu0 %v217
    %276 = vmatprep.subr.mxu0 0.0
    %277 = vmatpush1.msra.mxu0 %v216
    %278 = vmatprep.subr.mxu0 0.0
    %279 = vmatpush1.msra.mxu0 %v215
    %280 = vmatprep.subr.mxu0 0.0
    %281 = vmatpush1.msra.mxu0 %v214
    %282 = vmatprep.subr.mxu0 0.0
    %283 = vmatpush1.msra.mxu0 %v213
    %284 = vmatprep.subr.mxu0 0.0
    %285 = vmatpush2.msra.mxu0 %v244
    %286 = vmatprep.subr.mxu0 0.0
    %287 = vmatpush2.msra.mxu0 %v243
    %288 = vmatprep.subr.mxu0 0.0
    %289 = vmatpush2.msra.mxu0 %v242
    %290 = vmatprep.subr.mxu0 0.0
    %291 = vmatpush2.msra.mxu0 %v241
    %292 = vmatprep.subr.mxu0 0.0
    %293 = vmatpush2.msra.mxu0 %v240
    %294 = vmatprep.subr.mxu0 0.0
    %295 = vmatpush2.msra.mxu0 %v239
    %296 = vmatprep.subr.mxu0 0.0
    %297 = vmatpush2.msra.mxu0 %v238
    %298 = vmatprep.subr.mxu0 0.0
    %299 = vmatpush2.msra.mxu0 %v237
    %300 = vmatprep.subr.mxu0 0.0
    %301 = vmatpush2.msra.mxu0 %v236
    %302 = vmatprep.subr.mxu0 0.0
    %303 = vmatpush2.msra.mxu0 %v235
    %304 = vmatprep.subr.mxu0 0.0
    %305 = vmatpush2.msra.mxu0 %v234
    %306 = vmatprep.subr.mxu0 0.0
    %307 = vmatpush2.msra.mxu0 %v233
    %308 = vmatprep.subr.mxu0 0.0
    %309 = vmatpush2.msra.mxu0 %v232
    %310 = vmatprep.subr.mxu0 0.0
    %311 = vmatpush2.msra.mxu0 %v231
    %312 = vmatprep.subr.mxu0 0.0
    %313 = vmatpush2.msra.mxu0 %v230
    %314 = vmatprep.subr.mxu0 0.0
    %315 = vmatpush2.msra.mxu0 %v229
    %316 = vmatprep.mubr.f32.mxu0 %v198
    %317 = vmatmul.mubr.f32.gmra.mxu0 %v197
    %v318 = vpop.f32.mrf.mxu0
    %v319 = vadd.f32 %v250, %v318
    %v320 = vpop.f32.mrf.mxu0
    %321 = vmatprep.mubr.f32.mxu0 %v200
    %322 = vmatmul.mubr.f32.gmra.mxu0 %v199
    %v323 = vpop.f32.mrf.mxu0
    %v324 = vadd.f32 %v250, %v323
    %v325 = vpop.f32.mrf.mxu0
    %326 = vmatprep.mubr.f32.mxu0 %v202
    %327 = vmatmul.mubr.f32.gmra.mxu0 %v201
    %v328 = vpop.f32.mrf.mxu0
    %v329 = vadd.f32 %v250, %v328
    %v330 = vpop.f32.mrf.mxu0
    %331 = vmatprep.mubr.f32.mxu0 %v204
    %332 = vmatmul.mubr.f32.gmra.mxu0 %v203
    %v333 = vpop.f32.mrf.mxu0
    %v334 = vadd.f32 %v250, %v333
    %v335 = vpop.f32.mrf.mxu0
    %336 = vmatprep.mubr.f32.mxu0 %v206
    %337 = vmatmul.mubr.f32.gmra.mxu0 %v205
    %v338 = vpop.f32.mrf.mxu0
    %v339 = vadd.f32 %v250, %v338
    %v340 = vpop.f32.mrf.mxu0
    %341 = vmatprep.mubr.f32.mxu0 %v208
    %342 = vmatmul.mubr.f32.gmra.mxu0 %v207
    %v343 = vpop.f32.mrf.mxu0
    %v344 = vadd.f32 %v250, %v343
    %v345 = vpop.f32.mrf.mxu0
    %346 = vmatprep.mubr.f32.mxu0 %v210
    %347 = vmatmul.mubr.f32.gmra.mxu0 %v209
    %v348 = vpop.f32.mrf.mxu0
    %v349 = vadd.f32 %v250, %v348
    %v350 = vpop.f32.mrf.mxu0
    %351 = vmatprep.mubr.f32.mxu0 %v212
    %352 = vmatmul.mubr.f32.gmra.mxu0 %v211
    %v353 = vpop.f32.mrf.mxu0
    %v354 = vadd.f32 %v250, %v353
    %v355 = vpop.f32.mrf.mxu0
    %356 = vdwg.mxu0
    %v357 = vlaneseq
    %v358 = vand.u32 %v357, 127
    %vm359 = vcmp.ge.s32.totalorder %v358, 64
    %vm360 = vcmp.lt.s32.totalorder %v358, 96
    %vm361 = vmand %vm359, %vm360
    %v362 = vsel %vm361, 1.0, 0.5
    %vm363 = vcmask 261120
    %v365 = vsel %vm363, 0.0, 0
    %367 = vmatprep.subr.mxu0 0.0
    %368 = vmatpush1.msra.mxu0 0.0
    %369 = vmatprep.subr.mxu0 0.0
    %370 = vmatpush1.msra.mxu0 0.0
    %371 = vmatprep.subr.mxu0 0.0
    %372 = vmatpush1.msra.mxu0 0.0
    %373 = vmatprep.subr.mxu0 0.0
    %374 = vmatpush1.msra.mxu0 0.0
    %375 = vmatprep.subr.mxu0 0.0
    %376 = vmatpush1.msra.mxu0 0.0
    %377 = vmatprep.subr.mxu0 0.0
    %378 = vmatpush1.msra.mxu0 0.0
    %379 = vmatprep.subr.mxu0 0.0
    %380 = vmatpush1.msra.mxu0 0.0
    %381 = vmatprep.subr.mxu0 0.0
    %382 = vmatpush1.msra.mxu0 0.0
    %383 = vmatprep.subr.mxu0 0.0
    %384 = vmatpush1.msra.mxu0 0.0
    %385 = vmatprep.subr.mxu0 0.0
    %386 = vmatpush1.msra.mxu0 0.0
    %387 = vmatprep.subr.mxu0 0.0
    %388 = vmatpush1.msra.mxu0 0.0
    %389 = vmatprep.subr.mxu0 0.0
    %390 = vmatpush1.msra.mxu0 0.0
    %391 = vmatprep.subr.mxu0 0.0
    %392 = vmatpush1.msra.mxu0 %v196
    %393 = vmatprep.subr.mxu0 0.0
    %394 = vmatpush1.msra.mxu0 %v195
    %395 = vmatprep.subr.mxu0 0.0
    %396 = vmatpush1.msra.mxu0 %v194
    %397 = vmatprep.subr.mxu0 0.0
    %398 = vmatpush1.msra.mxu0 %v193
    %399 = vmatprep.subr.mxu0 0.0
    %400 = vmatpush2.msra.mxu0 0.0
    %401 = vmatprep.subr.mxu0 0.0
    %402 = vmatpush2.msra.mxu0 0.0
    %403 = vmatprep.subr.mxu0 0.0
    %404 = vmatpush2.msra.mxu0 0.0
    %405 = vmatprep.subr.mxu0 0.0
    %406 = vmatpush2.msra.mxu0 0.0
    %407 = vmatprep.subr.mxu0 0.0
    %408 = vmatpush2.msra.mxu0 0.0
    %409 = vmatprep.subr.mxu0 0.0
    %410 = vmatpush2.msra.mxu0 0.0
    %411 = vmatprep.subr.mxu0 0.0
    %412 = vmatpush2.msra.mxu0 0.0
    %413 = vmatprep.subr.mxu0 0.0
    %414 = vmatpush2.msra.mxu0 0.0
    %415 = vmatprep.subr.mxu0 0.0
    %416 = vmatpush2.msra.mxu0 0.0
    %417 = vmatprep.subr.mxu0 0.0
    %418 = vmatpush2.msra.mxu0 0.0
    %419 = vmatprep.subr.mxu0 0.0
    %420 = vmatpush2.msra.mxu0 0.0
    %421 = vmatprep.subr.mxu0 0.0
    %422 = vmatpush2.msra.mxu0 0.0
    %423 = vmatprep.subr.mxu0 0.0
    %424 = vmatpush2.msra.mxu0 0.0
    %425 = vmatprep.subr.mxu0 0.0
    %426 = vmatpush2.msra.mxu0 0.0
    %427 = vmatprep.subr.mxu0 0.0
    %428 = vmatpush2.msra.mxu0 0.0
    %429 = vmatprep.subr.mxu0 0.0
    %430 = vmatpush2.msra.mxu0 0.0
    %431 = vmatprep.mubr.f32.mxu0 0.0
    %432 = vmatmul.mubr.f32.gmra.mxu0 %v365
    %v433 = vpop.f32.mrf.mxu0
    %v434 = vadd.f32 0.0, %v433
    %v435 = vpop.f32.mrf.mxu0
    %436 = vdwg.mxu0
    %v437 = vadd.f32 %v319, %v434
    %v438 = vmul.f32 %v437, %v362
    %v439 = vtanh.pop %v438
    %v440 = vmul.f32 %v439, 0.5
    %v441 = vadd.f32 %v440, 0.5
    %v442 = vsel %vm361, %v439, %v441
    %v443 = vmul.f32 %v442, 0.0
    %445 = vrot.lane.b32.xlu0 %v442, 64
    %v446 = vpop.permute.xlu0 %445
    %v448 = vmul.f32 %v442, %v446
    %450 = vrot.lane.b32.xlu0 %v448, 32
    %v451 = vpop.permute.xlu0 %450
    %v453 = vadd.f32 %v443, %v451
    %v454 = vtanh.pop %v453
    %456 = vrot.lane.b32.xlu0 %v454, 64
    %v457 = vpop.permute.xlu0 %456
    %v459 = vmul.f32 %v442, %v457
    %461 = vrot.lane.b32.xlu0 %v459, 32
    %v462 = vpop.permute.xlu0 %461
    %v463 = vsel %vm363, %v462, 0
    %465 = vmatprep.subr.mxu0 0.0
    %466 = vmatpush1.msra.mxu0 0.0
    %467 = vmatprep.subr.mxu0 0.0
    %468 = vmatpush1.msra.mxu0 0.0
    %469 = vmatprep.subr.mxu0 0.0
    %470 = vmatpush1.msra.mxu0 0.0
    %471 = vmatprep.subr.mxu0 0.0
    %472 = vmatpush1.msra.mxu0 0.0
    %473 = vmatprep.subr.mxu0 0.0
    %474 = vmatpush1.msra.mxu0 0.0
    %475 = vmatprep.subr.mxu0 0.0
    %476 = vmatpush1.msra.mxu0 0.0
    %477 = vmatprep.subr.mxu0 0.0
    %478 = vmatpush1.msra.mxu0 0.0
    %479 = vmatprep.subr.mxu0 0.0
    %480 = vmatpush1.msra.mxu0 0.0
    %481 = vmatprep.subr.mxu0 0.0
    %482 = vmatpush1.msra.mxu0 0.0
    %483 = vmatprep.subr.mxu0 0.0
    %484 = vmatpush1.msra.mxu0 0.0
    %485 = vmatprep.subr.mxu0 0.0
    %486 = vmatpush1.msra.mxu0 0.0
    %487 = vmatprep.subr.mxu0 0.0
    %488 = vmatpush1.msra.mxu0 0.0
    %489 = vmatprep.subr.mxu0 0.0
    %490 = vmatpush1.msra.mxu0 %v196
    %491 = vmatprep.subr.mxu0 0.0
    %492 = vmatpush1.msra.mxu0 %v195
    %493 = vmatprep.subr.mxu0 0.0
    %494 = vmatpush1.msra.mxu0 %v194
    %495 = vmatprep.subr.mxu0 0.0
    %496 = vmatpush1.msra.mxu0 %v193
    %497 = vmatprep.subr.mxu0 0.0
    %498 = vmatpush2.msra.mxu0 0.0
    %499 = vmatprep.subr.mxu0 0.0
    %500 = vmatpush2.msra.mxu0 0.0
    %501 = vmatprep.subr.mxu0 0.0
    %502 = vmatpush2.msra.mxu0 0.0
    %503 = vmatprep.subr.mxu0 0.0
    %504 = vmatpush2.msra.mxu0 0.0
    %505 = vmatprep.subr.mxu0 0.0
    %506 = vmatpush2.msra.mxu0 0.0
    %507 = vmatprep.subr.mxu0 0.0
    %508 = vmatpush2.msra.mxu0 0.0
    %509 = vmatprep.subr.mxu0 0.0
    %510 = vmatpush2.msra.mxu0 0.0
    %511 = vmatprep.subr.mxu0 0.0
    %512 = vmatpush2.msra.mxu0 0.0
    %513 = vmatprep.subr.mxu0 0.0
    %514 = vmatpush2.msra.mxu0 0.0
    %515 = vmatprep.subr.mxu0 0.0
    %516 = vmatpush2.msra.mxu0 0.0
    %517 = vmatprep.subr.mxu0 0.0
    %518 = vmatpush2.msra.mxu0 0.0
    %519 = vmatprep.subr.mxu0 0.0
    %520 = vmatpush2.msra.mxu0 0.0
    %521 = vmatprep.subr.mxu0 0.0
    %522 = vmatpush2.msra.mxu0 0.0
    %523 = vmatprep.subr.mxu0 0.0
    %524 = vmatpush2.msra.mxu0 0.0
    %525 = vmatprep.subr.mxu0 0.0
    %526 = vmatpush2.msra.mxu0 0.0
    %527 = vmatprep.subr.mxu0 0.0
    %528 = vmatpush2.msra.mxu0 0.0
    %529 = vmatprep.mubr.f32.mxu0 0.0
    %530 = vmatmul.mubr.f32.gmra.mxu0 %v463
    %v531 = vpop.f32.mrf.mxu0
    %v532 = vadd.f32 0.0, %v531
    %v533 = vpop.f32.mrf.mxu0
    %534 = vdwg.mxu0
    %v535 = vadd.f32 %v324, %v532
    %v536 = vmul.f32 %v535, %v362
    %v537 = vtanh.pop %v536
    %v538 = vmul.f32 %v537, 0.5
    %v539 = vadd.f32 %v538, 0.5
    %v540 = vsel %vm361, %v537, %v539
    %v541 = vmul.f32 %v540, %v453
    %543 = vrot.lane.b32.xlu0 %v540, 64
    %v544 = vpop.permute.xlu0 %543
    %v546 = vmul.f32 %v540, %v544
    %548 = vrot.lane.b32.xlu0 %v546, 32
    %v549 = vpop.permute.xlu0 %548
    %v551 = vadd.f32 %v541, %v549
    %v552 = vtanh.pop %v551
    %554 = vrot.lane.b32.xlu0 %v552, 64
    %v555 = vpop.permute.xlu0 %554
    %v557 = vmul.f32 %v540, %v555
    %559 = vrot.lane.b32.xlu0 %v557, 32
    %v560 = vpop.permute.xlu0 %559
    %v561 = vsel %vm363, %v560, 0
    %563 = vmatprep.subr.mxu0 0.0
    %564 = vmatpush1.msra.mxu0 0.0
    %565 = vmatprep.subr.mxu0 0.0
    %566 = vmatpush1.msra.mxu0 0.0
    %567 = vmatprep.subr.mxu0 0.0
    %568 = vmatpush1.msra.mxu0 0.0
    %569 = vmatprep.subr.mxu0 0.0
    %570 = vmatpush1.msra.mxu0 0.0
    %571 = vmatprep.subr.mxu0 0.0
    %572 = vmatpush1.msra.mxu0 0.0
    %573 = vmatprep.subr.mxu0 0.0
    %574 = vmatpush1.msra.mxu0 0.0
    %575 = vmatprep.subr.mxu0 0.0
    %576 = vmatpush1.msra.mxu0 0.0
    %577 = vmatprep.subr.mxu0 0.0
    %578 = vmatpush1.msra.mxu0 0.0
    %579 = vmatprep.subr.mxu0 0.0
    %580 = vmatpush1.msra.mxu0 0.0
    %581 = vmatprep.subr.mxu0 0.0
    %582 = vmatpush1.msra.mxu0 0.0
    %583 = vmatprep.subr.mxu0 0.0
    %584 = vmatpush1.msra.mxu0 0.0
    %585 = vmatprep.subr.mxu0 0.0
    %586 = vmatpush1.msra.mxu0 0.0
    %587 = vmatprep.subr.mxu0 0.0
    %588 = vmatpush1.msra.mxu0 %v196
    %589 = vmatprep.subr.mxu0 0.0
    %590 = vmatpush1.msra.mxu0 %v195
    %591 = vmatprep.subr.mxu0 0.0
    %592 = vmatpush1.msra.mxu0 %v194
    %593 = vmatprep.subr.mxu0 0.0
    %594 = vmatpush1.msra.mxu0 %v193
    %595 = vmatprep.subr.mxu0 0.0
    %596 = vmatpush2.msra.mxu0 0.0
    %597 = vmatprep.subr.mxu0 0.0
    %598 = vmatpush2.msra.mxu0 0.0
    %599 = vmatprep.subr.mxu0 0.0
    %600 = vmatpush2.msra.mxu0 0.0
    %601 = vmatprep.subr.mxu0 0.0
    %602 = vmatpush2.msra.mxu0 0.0
    %603 = vmatprep.subr.mxu0 0.0
    %604 = vmatpush2.msra.mxu0 0.0
    %605 = vmatprep.subr.mxu0 0.0
    %606 = vmatpush2.msra.mxu0 0.0
    %607 = vmatprep.subr.mxu0 0.0
    %608 = vmatpush2.msra.mxu0 0.0
    %609 = vmatprep.subr.mxu0 0.0
    %610 = vmatpush2.msra.mxu0 0.0
    %611 = vmatprep.subr.mxu0 0.0
    %612 = vmatpush2.msra.mxu0 0.0
    %613 = vmatprep.subr.mxu0 0.0
    %614 = vmatpush2.msra.mxu0 0.0
    %615 = vmatprep.subr.mxu0 0.0
    %616 = vmatpush2.msra.mxu0 0.0
    %617 = vmatprep.subr.mxu0 0.0
    %618 = vmatpush2.msra.mxu0 0.0
    %619 = vmatprep.subr.mxu0 0.0
    %620 = vmatpush2.msra.mxu0 0.0
    %621 = vmatprep.subr.mxu0 0.0
    %622 = vmatpush2.msra.mxu0 0.0
    %623 = vmatprep.subr.mxu0 0.0
    %624 = vmatpush2.msra.mxu0 0.0
    %625 = vmatprep.subr.mxu0 0.0
    %626 = vmatpush2.msra.mxu0 0.0
    %627 = vmatprep.mubr.f32.mxu0 0.0
    %628 = vmatmul.mubr.f32.gmra.mxu0 %v561
    %v629 = vpop.f32.mrf.mxu0
    %v630 = vadd.f32 0.0, %v629
    %v631 = vpop.f32.mrf.mxu0
    %632 = vdwg.mxu0
    %v633 = vadd.f32 %v329, %v630
    %v634 = vmul.f32 %v633, %v362
    %v635 = vtanh.pop %v634
    %v636 = vmul.f32 %v635, 0.5
    %v637 = vadd.f32 %v636, 0.5
    %v638 = vsel %vm361, %v635, %v637
    %v639 = vmul.f32 %v638, %v551
    %641 = vrot.lane.b32.xlu0 %v638, 64
    %v642 = vpop.permute.xlu0 %641
    %v644 = vmul.f32 %v638, %v642
    %646 = vrot.lane.b32.xlu0 %v644, 32
    %v647 = vpop.permute.xlu0 %646
    %v649 = vadd.f32 %v639, %v647
    %v650 = vtanh.pop %v649
    %652 = vrot.lane.b32.xlu0 %v650, 64
    %v653 = vpop.permute.xlu0 %652
    %v655 = vmul.f32 %v638, %v653
    %657 = vrot.lane.b32.xlu0 %v655, 32
    %v658 = vpop.permute.xlu0 %657
    %v659 = vsel %vm363, %v658, 0
    %661 = vmatprep.subr.mxu0 0.0
    %662 = vmatpush1.msra.mxu0 0.0
    %663 = vmatprep.subr.mxu0 0.0
    %664 = vmatpush1.msra.mxu0 0.0
    %665 = vmatprep.subr.mxu0 0.0
    %666 = vmatpush1.msra.mxu0 0.0
    %667 = vmatprep.subr.mxu0 0.0
    %668 = vmatpush1.msra.mxu0 0.0
    %669 = vmatprep.subr.mxu0 0.0
    %670 = vmatpush1.msra.mxu0 0.0
    %671 = vmatprep.subr.mxu0 0.0
    %672 = vmatpush1.msra.mxu0 0.0
    %673 = vmatprep.subr.mxu0 0.0
    %674 = vmatpush1.msra.mxu0 0.0
    %675 = vmatprep.subr.mxu0 0.0
    %676 = vmatpush1.msra.mxu0 0.0
    %677 = vmatprep.subr.mxu0 0.0
    %678 = vmatpush1.msra.mxu0 0.0
    %679 = vmatprep.subr.mxu0 0.0
    %680 = vmatpush1.msra.mxu0 0.0
    %681 = vmatprep.subr.mxu0 0.0
    %682 = vmatpush1.msra.mxu0 0.0
    %683 = vmatprep.subr.mxu0 0.0
    %684 = vmatpush1.msra.mxu0 0.0
    %685 = vmatprep.subr.mxu0 0.0
    %686 = vmatpush1.msra.mxu0 %v196
    %687 = vmatprep.subr.mxu0 0.0
    %688 = vmatpush1.msra.mxu0 %v195
    %689 = vmatprep.subr.mxu0 0.0
    %690 = vmatpush1.msra.mxu0 %v194
    %691 = vmatprep.subr.mxu0 0.0
    %692 = vmatpush1.msra.mxu0 %v193
    %693 = vmatprep.subr.mxu0 0.0
    %694 = vmatpush2.msra.mxu0 0.0
    %695 = vmatprep.subr.mxu0 0.0
    %696 = vmatpush2.msra.mxu0 0.0
    %697 = vmatprep.subr.mxu0 0.0
    %698 = vmatpush2.msra.mxu0 0.0
    %699 = vmatprep.subr.mxu0 0.0
    %700 = vmatpush2.msra.mxu0 0.0
    %701 = vmatprep.subr.mxu0 0.0
    %702 = vmatpush2.msra.mxu0 0.0
    %703 = vmatprep.subr.mxu0 0.0
    %704 = vmatpush2.msra.mxu0 0.0
    %705 = vmatprep.subr.mxu0 0.0
    %706 = vmatpush2.msra.mxu0 0.0
    %707 = vmatprep.subr.mxu0 0.0
    %708 = vmatpush2.msra.mxu0 0.0
    %709 = vmatprep.subr.mxu0 0.0
    %710 = vmatpush2.msra.mxu0 0.0
    %711 = vmatprep.subr.mxu0 0.0
    %712 = vmatpush2.msra.mxu0 0.0
    %713 = vmatprep.subr.mxu0 0.0
    %714 = vmatpush2.msra.mxu0 0.0
    %715 = vmatprep.subr.mxu0 0.0
    %716 = vmatpush2.msra.mxu0 0.0
    %717 = vmatprep.subr.mxu0 0.0
    %718 = vmatpush2.msra.mxu0 0.0
    %719 = vmatprep.subr.mxu0 0.0
    %720 = vmatpush2.msra.mxu0 0.0
    %721 = vmatprep.subr.mxu0 0.0
    %722 = vmatpush2.msra.mxu0 0.0
    %723 = vmatprep.subr.mxu0 0.0
    %724 = vmatpush2.msra.mxu0 0.0
    %725 = vmatprep.mubr.f32.mxu0 0.0
    %726 = vmatmul.mubr.f32.gmra.mxu0 %v659
    %v727 = vpop.f32.mrf.mxu0
    %v728 = vadd.f32 0.0, %v727
    %v729 = vpop.f32.mrf.mxu0
    %730 = vdwg.mxu0
    %v731 = vadd.f32 %v334, %v728
    %v732 = vmul.f32 %v731, %v362
    %v733 = vtanh.pop %v732
    %v734 = vmul.f32 %v733, 0.5
    %v735 = vadd.f32 %v734, 0.5
    %v736 = vsel %vm361, %v733, %v735
    %v737 = vmul.f32 %v736, %v649
    %739 = vrot.lane.b32.xlu0 %v736, 64
    %v740 = vpop.permute.xlu0 %739
    %v742 = vmul.f32 %v736, %v740
    %744 = vrot.lane.b32.xlu0 %v742, 32
    %v745 = vpop.permute.xlu0 %744
    %v747 = vadd.f32 %v737, %v745
    %v748 = vtanh.pop %v747
    %750 = vrot.lane.b32.xlu0 %v748, 64
    %v751 = vpop.permute.xlu0 %750
    %v753 = vmul.f32 %v736, %v751
    %755 = vrot.lane.b32.xlu0 %v753, 32
    %v756 = vpop.permute.xlu0 %755
    %v757 = vsel %vm363, %v756, 0
    %759 = vmatprep.subr.mxu0 0.0
    %760 = vmatpush1.msra.mxu0 0.0
    %761 = vmatprep.subr.mxu0 0.0
    %762 = vmatpush1.msra.mxu0 0.0
    %763 = vmatprep.subr.mxu0 0.0
    %764 = vmatpush1.msra.mxu0 0.0
    %765 = vmatprep.subr.mxu0 0.0
    %766 = vmatpush1.msra.mxu0 0.0
    %767 = vmatprep.subr.mxu0 0.0
    %768 = vmatpush1.msra.mxu0 0.0
    %769 = vmatprep.subr.mxu0 0.0
    %770 = vmatpush1.msra.mxu0 0.0
    %771 = vmatprep.subr.mxu0 0.0
    %772 = vmatpush1.msra.mxu0 0.0
    %773 = vmatprep.subr.mxu0 0.0
    %774 = vmatpush1.msra.mxu0 0.0
    %775 = vmatprep.subr.mxu0 0.0
    %776 = vmatpush1.msra.mxu0 0.0
    %777 = vmatprep.subr.mxu0 0.0
    %778 = vmatpush1.msra.mxu0 0.0
    %779 = vmatprep.subr.mxu0 0.0
    %780 = vmatpush1.msra.mxu0 0.0
    %781 = vmatprep.subr.mxu0 0.0
    %782 = vmatpush1.msra.mxu0 0.0
    %783 = vmatprep.subr.mxu0 0.0
    %784 = vmatpush1.msra.mxu0 %v196
    %785 = vmatprep.subr.mxu0 0.0
    %786 = vmatpush1.msra.mxu0 %v195
    %787 = vmatprep.subr.mxu0 0.0
    %788 = vmatpush1.msra.mxu0 %v194
    %789 = vmatprep.subr.mxu0 0.0
    %790 = vmatpush1.msra.mxu0 %v193
    %791 = vmatprep.subr.mxu0 0.0
    %792 = vmatpush2.msra.mxu0 0.0
    %793 = vmatprep.subr.mxu0 0.0
    %794 = vmatpush2.msra.mxu0 0.0
    %795 = vmatprep.subr.mxu0 0.0
    %796 = vmatpush2.msra.mxu0 0.0
    %797 = vmatprep.subr.mxu0 0.0
    %798 = vmatpush2.msra.mxu0 0.0
    %799 = vmatprep.subr.mxu0 0.0
    %800 = vmatpush2.msra.mxu0 0.0
    %801 = vmatprep.subr.mxu0 0.0
    %802 = vmatpush2.msra.mxu0 0.0
    %803 = vmatprep.subr.mxu0 0.0
    %804 = vmatpush2.msra.mxu0 0.0
    %805 = vmatprep.subr.mxu0 0.0
    %806 = vmatpush2.msra.mxu0 0.0
    %807 = vmatprep.subr.mxu0 0.0
    %808 = vmatpush2.msra.mxu0 0.0
    %809 = vmatprep.subr.mxu0 0.0
    %810 = vmatpush2.msra.mxu0 0.0
    %811 = vmatprep.subr.mxu0 0.0
    %812 = vmatpush2.msra.mxu0 0.0
    %813 = vmatprep.subr.mxu0 0.0
    %814 = vmatpush2.msra.mxu0 0.0
    %815 = vmatprep.subr.mxu0 0.0
    %816 = vmatpush2.msra.mxu0 0.0
    %817 = vmatprep.subr.mxu0 0.0
    %818 = vmatpush2.msra.mxu0 0.0
    %819 = vmatprep.subr.mxu0 0.0
    %820 = vmatpush2.msra.mxu0 0.0
    %821 = vmatprep.subr.mxu0 0.0
    %822 = vmatpush2.msra.mxu0 0.0
    %823 = vmatprep.mubr.f32.mxu0 0.0
    %824 = vmatmul.mubr.f32.gmra.mxu0 %v757
    %v825 = vpop.f32.mrf.mxu0
    %v826 = vadd.f32 0.0, %v825
    %v827 = vpop.f32.mrf.mxu0
    %828 = vdwg.mxu0
    %v829 = vadd.f32 %v339, %v826
    %v830 = vmul.f32 %v829, %v362
    %v831 = vtanh.pop %v830
    %v832 = vmul.f32 %v831, 0.5
    %v833 = vadd.f32 %v832, 0.5
    %v834 = vsel %vm361, %v831, %v833
    %v835 = vmul.f32 %v834, %v747
    %837 = vrot.lane.b32.xlu0 %v834, 64
    %v838 = vpop.permute.xlu0 %837
    %v840 = vmul.f32 %v834, %v838
    %842 = vrot.lane.b32.xlu0 %v840, 32
    %v843 = vpop.permute.xlu0 %842
    %v845 = vadd.f32 %v835, %v843
    %v846 = vtanh.pop %v845
    %848 = vrot.lane.b32.xlu0 %v846, 64
    %v849 = vpop.permute.xlu0 %848
    %v851 = vmul.f32 %v834, %v849
    %853 = vrot.lane.b32.xlu0 %v851, 32
    %v854 = vpop.permute.xlu0 %853
    %v855 = vsel %vm363, %v854, 0
    %857 = vmatprep.subr.mxu0 0.0
    %858 = vmatpush1.msra.mxu0 0.0
    %859 = vmatprep.subr.mxu0 0.0
    %860 = vmatpush1.msra.mxu0 0.0
    %861 = vmatprep.subr.mxu0 0.0
    %862 = vmatpush1.msra.mxu0 0.0
    %863 = vmatprep.subr.mxu0 0.0
    %864 = vmatpush1.msra.mxu0 0.0
    %865 = vmatprep.subr.mxu0 0.0
    %866 = vmatpush1.msra.mxu0 0.0
    %867 = vmatprep.subr.mxu0 0.0
    %868 = vmatpush1.msra.mxu0 0.0
    %869 = vmatprep.subr.mxu0 0.0
    %870 = vmatpush1.msra.mxu0 0.0
    %871 = vmatprep.subr.mxu0 0.0
    %872 = vmatpush1.msra.mxu0 0.0
    %873 = vmatprep.subr.mxu0 0.0
    %874 = vmatpush1.msra.mxu0 0.0
    %875 = vmatprep.subr.mxu0 0.0
    %876 = vmatpush1.msra.mxu0 0.0
    %877 = vmatprep.subr.mxu0 0.0
    %878 = vmatpush1.msra.mxu0 0.0
    %879 = vmatprep.subr.mxu0 0.0
    %880 = vmatpush1.msra.mxu0 0.0
    %881 = vmatprep.subr.mxu0 0.0
    %882 = vmatpush1.msra.mxu0 %v196
    %883 = vmatprep.subr.mxu0 0.0
    %884 = vmatpush1.msra.mxu0 %v195
    %885 = vmatprep.subr.mxu0 0.0
    %886 = vmatpush1.msra.mxu0 %v194
    %887 = vmatprep.subr.mxu0 0.0
    %888 = vmatpush1.msra.mxu0 %v193
    %889 = vmatprep.subr.mxu0 0.0
    %890 = vmatpush2.msra.mxu0 0.0
    %891 = vmatprep.subr.mxu0 0.0
    %892 = vmatpush2.msra.mxu0 0.0
    %893 = vmatprep.subr.mxu0 0.0
    %894 = vmatpush2.msra.mxu0 0.0
    %895 = vmatprep.subr.mxu0 0.0
    %896 = vmatpush2.msra.mxu0 0.0
    %897 = vmatprep.subr.mxu0 0.0
    %898 = vmatpush2.msra.mxu0 0.0
    %899 = vmatprep.subr.mxu0 0.0
    %900 = vmatpush2.msra.mxu0 0.0
    %901 = vmatprep.subr.mxu0 0.0
    %902 = vmatpush2.msra.mxu0 0.0
    %903 = vmatprep.subr.mxu0 0.0
    %904 = vmatpush2.msra.mxu0 0.0
    %905 = vmatprep.subr.mxu0 0.0
    %906 = vmatpush2.msra.mxu0 0.0
    %907 = vmatprep.subr.mxu0 0.0
    %908 = vmatpush2.msra.mxu0 0.0
    %909 = vmatprep.subr.mxu0 0.0
    %910 = vmatpush2.msra.mxu0 0.0
    %911 = vmatprep.subr.mxu0 0.0
    %912 = vmatpush2.msra.mxu0 0.0
    %913 = vmatprep.subr.mxu0 0.0
    %914 = vmatpush2.msra.mxu0 0.0
    %915 = vmatprep.subr.mxu0 0.0
    %916 = vmatpush2.msra.mxu0 0.0
    %917 = vmatprep.subr.mxu0 0.0
    %918 = vmatpush2.msra.mxu0 0.0
    %919 = vmatprep.subr.mxu0 0.0
    %920 = vmatpush2.msra.mxu0 0.0
    %921 = vmatprep.mubr.f32.mxu0 0.0
    %922 = vmatmul.mubr.f32.gmra.mxu0 %v855
    %v923 = vpop.f32.mrf.mxu0
    %v924 = vadd.f32 0.0, %v923
    %v925 = vpop.f32.mrf.mxu0
    %926 = vdwg.mxu0
    %v927 = vadd.f32 %v344, %v924
    %v928 = vmul.f32 %v927, %v362
    %v929 = vtanh.pop %v928
    %v930 = vmul.f32 %v929, 0.5
    %v931 = vadd.f32 %v930, 0.5
    %v932 = vsel %vm361, %v929, %v931
    %v933 = vmul.f32 %v932, %v845
    %935 = vrot.lane.b32.xlu0 %v932, 64
    %v936 = vpop.permute.xlu0 %935
    %v938 = vmul.f32 %v932, %v936
    %940 = vrot.lane.b32.xlu0 %v938, 32
    %v941 = vpop.permute.xlu0 %940
    %v943 = vadd.f32 %v933, %v941
    %v944 = vtanh.pop %v943
    %946 = vrot.lane.b32.xlu0 %v944, 64
    %v947 = vpop.permute.xlu0 %946
    %v949 = vmul.f32 %v932, %v947
    %951 = vrot.lane.b32.xlu0 %v949, 32
    %v952 = vpop.permute.xlu0 %951
    %v953 = vsel %vm363, %v952, 0
    %955 = vmatprep.subr.mxu0 0.0
    %956 = vmatpush1.msra.mxu0 0.0
    %957 = vmatprep.subr.mxu0 0.0
    %958 = vmatpush1.msra.mxu0 0.0
    %959 = vmatprep.subr.mxu0 0.0
    %960 = vmatpush1.msra.mxu0 0.0
    %961 = vmatprep.subr.mxu0 0.0
    %962 = vmatpush1.msra.mxu0 0.0
    %963 = vmatprep.subr.mxu0 0.0
    %964 = vmatpush1.msra.mxu0 0.0
    %965 = vmatprep.subr.mxu0 0.0
    %966 = vmatpush1.msra.mxu0 0.0
    %967 = vmatprep.subr.mxu0 0.0
    %968 = vmatpush1.msra.mxu0 0.0
    %969 = vmatprep.subr.mxu0 0.0
    %970 = vmatpush1.msra.mxu0 0.0
    %971 = vmatprep.subr.mxu0 0.0
    %972 = vmatpush1.msra.mxu0 0.0
    %973 = vmatprep.subr.mxu0 0.0
    %974 = vmatpush1.msra.mxu0 0.0
    %975 = vmatprep.subr.mxu0 0.0
    %976 = vmatpush1.msra.mxu0 0.0
    %977 = vmatprep.subr.mxu0 0.0
    %978 = vmatpush1.msra.mxu0 0.0
    %979 = vmatprep.subr.mxu0 0.0
    %980 = vmatpush1.msra.mxu0 %v196
    %981 = vmatprep.subr.mxu0 0.0
    %982 = vmatpush1.msra.mxu0 %v195
    %983 = vmatprep.subr.mxu0 0.0
    %984 = vmatpush1.msra.mxu0 %v194
    %985 = vmatprep.subr.mxu0 0.0
    %986 = vmatpush1.msra.mxu0 %v193
    %987 = vmatprep.subr.mxu0 0.0
    %988 = vmatpush2.msra.mxu0 0.0
    %989 = vmatprep.subr.mxu0 0.0
    %990 = vmatpush2.msra.mxu0 0.0
    %991 = vmatprep.subr.mxu0 0.0
    %992 = vmatpush2.msra.mxu0 0.0
    %993 = vmatprep.subr.mxu0 0.0
    %994 = vmatpush2.msra.mxu0 0.0
    %995 = vmatprep.subr.mxu0 0.0
    %996 = vmatpush2.msra.mxu0 0.0
    %997 = vmatprep.subr.mxu0 0.0
    %998 = vmatpush2.msra.mxu0 0.0
    %999 = vmatprep.subr.mxu0 0.0
    %1000 = vmatpush2.msra.mxu0 0.0
    %1001 = vmatprep.subr.mxu0 0.0
    %1002 = vmatpush2.msra.mxu0 0.0
    %1003 = vmatprep.subr.mxu0 0.0
    %1004 = vmatpush2.msra.mxu0 0.0
    %1005 = vmatprep.subr.mxu0 0.0
    %1006 = vmatpush2.msra.mxu0 0.0
    %1007 = vmatprep.subr.mxu0 0.0
    %1008 = vmatpush2.msra.mxu0 0.0
    %1009 = vmatprep.subr.mxu0 0.0
    %1010 = vmatpush2.msra.mxu0 0.0
    %1011 = vmatprep.subr.mxu0 0.0
    %1012 = vmatpush2.msra.mxu0 0.0
    %1013 = vmatprep.subr.mxu0 0.0
    %1014 = vmatpush2.msra.mxu0 0.0
    %1015 = vmatprep.subr.mxu0 0.0
    %1016 = vmatpush2.msra.mxu0 0.0
    %1017 = vmatprep.subr.mxu0 0.0
    %1018 = vmatpush2.msra.mxu0 0.0
    %1019 = vmatprep.mubr.f32.mxu0 0.0
    %1020 = vmatmul.mubr.f32.gmra.mxu0 %v953
    %v1021 = vpop.f32.mrf.mxu0
    %v1022 = vadd.f32 0.0, %v1021
    %v1023 = vpop.f32.mrf.mxu0
    %1024 = vdwg.mxu0
    %v1025 = vadd.f32 %v349, %v1022
    %v1026 = vmul.f32 %v1025, %v362
    %v1027 = vtanh.pop %v1026
    %v1028 = vmul.f32 %v1027, 0.5
    %v1029 = vadd.f32 %v1028, 0.5
    %v1030 = vsel %vm361, %v1027, %v1029
    %v1031 = vmul.f32 %v1030, %v943
    %1033 = vrot.lane.b32.xlu0 %v1030, 64
    %v1034 = vpop.permute.xlu0 %1033
    %v1036 = vmul.f32 %v1030, %v1034
    %1038 = vrot.lane.b32.xlu0 %v1036, 32
    %v1039 = vpop.permute.xlu0 %1038
    %v1041 = vadd.f32 %v1031, %v1039
    %v1042 = vtanh.pop %v1041
    %1044 = vrot.lane.b32.xlu0 %v1042, 64
    %v1045 = vpop.permute.xlu0 %1044
    %v1047 = vmul.f32 %v1030, %v1045
    %1049 = vrot.lane.b32.xlu0 %v1047, 32
    %v1050 = vpop.permute.xlu0 %1049
    %v1051 = vsel %vm363, %v1050, 0
    %1053 = vmatprep.subr.mxu0 0.0
    %1054 = vmatpush1.msra.mxu0 0.0
    %1055 = vmatprep.subr.mxu0 0.0
    %1056 = vmatpush1.msra.mxu0 0.0
    %1057 = vmatprep.subr.mxu0 0.0
    %1058 = vmatpush1.msra.mxu0 0.0
    %1059 = vmatprep.subr.mxu0 0.0
    %1060 = vmatpush1.msra.mxu0 0.0
    %1061 = vmatprep.subr.mxu0 0.0
    %1062 = vmatpush1.msra.mxu0 0.0
    %1063 = vmatprep.subr.mxu0 0.0
    %1064 = vmatpush1.msra.mxu0 0.0
    %1065 = vmatprep.subr.mxu0 0.0
    %1066 = vmatpush1.msra.mxu0 0.0
    %1067 = vmatprep.subr.mxu0 0.0
    %1068 = vmatpush1.msra.mxu0 0.0
    %1069 = vmatprep.subr.mxu0 0.0
    %1070 = vmatpush1.msra.mxu0 0.0
    %1071 = vmatprep.subr.mxu0 0.0
    %1072 = vmatpush1.msra.mxu0 0.0
    %1073 = vmatprep.subr.mxu0 0.0
    %1074 = vmatpush1.msra.mxu0 0.0
    %1075 = vmatprep.subr.mxu0 0.0
    %1076 = vmatpush1.msra.mxu0 0.0
    %1077 = vmatprep.subr.mxu0 0.0
    %1078 = vmatpush1.msra.mxu0 %v196
    %1079 = vmatprep.subr.mxu0 0.0
    %1080 = vmatpush1.msra.mxu0 %v195
    %1081 = vmatprep.subr.mxu0 0.0
    %1082 = vmatpush1.msra.mxu0 %v194
    %1083 = vmatprep.subr.mxu0 0.0
    %1084 = vmatpush1.msra.mxu0 %v193
    %1085 = vmatprep.subr.mxu0 0.0
    %1086 = vmatpush2.msra.mxu0 0.0
    %1087 = vmatprep.subr.mxu0 0.0
    %1088 = vmatpush2.msra.mxu0 0.0
    %1089 = vmatprep.subr.mxu0 0.0
    %1090 = vmatpush2.msra.mxu0 0.0
    %1091 = vmatprep.subr.mxu0 0.0
    %1092 = vmatpush2.msra.mxu0 0.0
    %1093 = vmatprep.subr.mxu0 0.0
    %1094 = vmatpush2.msra.mxu0 0.0
    %1095 = vmatprep.subr.mxu0 0.0
    %1096 = vmatpush2.msra.mxu0 0.0
    %1097 = vmatprep.subr.mxu0 0.0
    %1098 = vmatpush2.msra.mxu0 0.0
    %1099 = vmatprep.subr.mxu0 0.0
    %1100 = vmatpush2.msra.mxu0 0.0
    %1101 = vmatprep.subr.mxu0 0.0
    %1102 = vmatpush2.msra.mxu0 0.0
    %1103 = vmatprep.subr.mxu0 0.0
    %1104 = vmatpush2.msra.mxu0 0.0
    %1105 = vmatprep.subr.mxu0 0.0
    %1106 = vmatpush2.msra.mxu0 0.0
    %1107 = vmatprep.subr.mxu0 0.0
    %1108 = vmatpush2.msra.mxu0 0.0
    %1109 = vmatprep.subr.mxu0 0.0
    %1110 = vmatpush2.msra.mxu0 0.0
    %1111 = vmatprep.subr.mxu0 0.0
    %1112 = vmatpush2.msra.mxu0 0.0
    %1113 = vmatprep.subr.mxu0 0.0
    %1114 = vmatpush2.msra.mxu0 0.0
    %1115 = vmatprep.subr.mxu0 0.0
    %1116 = vmatpush2.msra.mxu0 0.0
    %1117 = vmatprep.mubr.f32.mxu0 0.0
    %1118 = vmatmul.mubr.f32.gmra.mxu0 %v1051
    %v1119 = vpop.f32.mrf.mxu0
    %v1120 = vadd.f32 0.0, %v1119
    %v1121 = vpop.f32.mrf.mxu0
    %1122 = vdwg.mxu0
    %v1123 = vadd.f32 %v354, %v1120
    %v1124 = vmul.f32 %v1123, %v362
    %v1125 = vtanh.pop %v1124
    %v1126 = vmul.f32 %v1125, 0.5
    %v1127 = vadd.f32 %v1126, 0.5
    %v1128 = vsel %vm361, %v1125, %v1127
    %v1129 = vmul.f32 %v1128, %v1041
    %1131 = vrot.lane.b32.xlu0 %v1128, 64
    %v1132 = vpop.permute.xlu0 %1131
    %v1134 = vmul.f32 %v1128, %v1132
    %1136 = vrot.lane.b32.xlu0 %v1134, 32
    %v1137 = vpop.permute.xlu0 %1136
    %v1139 = vadd.f32 %v1129, %v1137
    %v1140 = vtanh.pop %v1139
    %1142 = vrot.lane.b32.xlu0 %v1140, 64
    %v1143 = vpop.permute.xlu0 %1142
    %v1145 = vmul.f32 %v1128, %v1143
    %v1146 = vld [vmem:[#allocation9] sm:$0xff]
    %v1147 = vld [vmem:[#allocation9 + $0x8] sm:$0xff]
    %v1148 = vld [vmem:[#allocation9 + $0x10] sm:$0xff]
    %v1149 = vld [vmem:[#allocation9 + $0x18] sm:$0xff]
    %v1150 = vld [vmem:[#allocation9 + $0x20] sm:$0xff]
    %v1151 = vld [vmem:[#allocation9 + $0x28] sm:$0xff]
    %v1152 = vld [vmem:[#allocation9 + $0x30] sm:$0xff]
    %v1153 = vld [vmem:[#allocation9 + $0x38] sm:$0xff]
    %v1154 = vld [vmem:[%s5] sm:$0x3]
    %v1156 = vlaneseq
    %v1157 = vshrl.u32 %v1156, 7
    %v1158 = vsub.s32 0, %v1157
    %v1159 = vrot.slane %v1154, %v1158
    %v1160 = vlaneseq
    %v1161 = vshrl.u32 %v1160, 7
    %v1162 = vsub.s32 1, %v1161
    %v1163 = vrot.slane %v1154, %v1162
    %1167 = vrot.lane.b32.xlu0 %v1145, 32
    %v1168 = vpop.permute.xlu0 %1167
    %v1169 = vsel %vm363, %v1168, 0
    %1171 = vmatprep.subr.mxu0 0.0
    %1172 = vmatpush1.msra.mxu0 0.0
    %1173 = vmatprep.subr.mxu0 0.0
    %1174 = vmatpush1.msra.mxu0 0.0
    %1175 = vmatprep.subr.mxu0 0.0
    %1176 = vmatpush1.msra.mxu0 0.0
    %1177 = vmatprep.subr.mxu0 0.0
    %1178 = vmatpush1.msra.mxu0 0.0
    %1179 = vmatprep.subr.mxu0 0.0
    %1180 = vmatpush1.msra.mxu0 0.0
    %1181 = vmatprep.subr.mxu0 0.0
    %1182 = vmatpush1.msra.mxu0 0.0
    %1183 = vmatprep.subr.mxu0 0.0
    %1184 = vmatpush1.msra.mxu0 0.0
    %1185 = vmatprep.subr.mxu0 0.0
    %1186 = vmatpush1.msra.mxu0 0.0
    %1187 = vmatprep.subr.mxu0 0.0
    %1188 = vmatpush1.msra.mxu0 0.0
    %1189 = vmatprep.subr.mxu0 0.0
    %1190 = vmatpush1.msra.mxu0 0.0
    %1191 = vmatprep.subr.mxu0 0.0
    %1192 = vmatpush1.msra.mxu0 0.0
    %1193 = vmatprep.subr.mxu0 0.0
    %1194 = vmatpush1.msra.mxu0 0.0
    %1195 = vmatprep.subr.mxu0 %v1153
    %1196 = vmatpush1.msra.mxu0 %v1152
    %1197 = vmatprep.subr.mxu0 %v1151
    %1198 = vmatpush1.msra.mxu0 %v1150
    %1199 = vmatprep.subr.mxu0 %v1149
    %1200 = vmatpush1.msra.mxu0 %v1148
    %1201 = vmatprep.subr.mxu0 %v1147
    %1202 = vmatpush1.msra.mxu0 %v1146
    %1203 = vmatprep.subr.mxu0 0.0
    %1204 = vmatpush2.msra.mxu0 0.0
    %1205 = vmatprep.subr.mxu0 0.0
    %1206 = vmatpush2.msra.mxu0 0.0
    %1207 = vmatprep.subr.mxu0 0.0
    %1208 = vmatpush2.msra.mxu0 0.0
    %1209 = vmatprep.subr.mxu0 0.0
    %1210 = vmatpush2.msra.mxu0 0.0
    %1211 = vmatprep.subr.mxu0 0.0
    %1212 = vmatpush2.msra.mxu0 0.0
    %1213 = vmatprep.subr.mxu0 0.0
    %1214 = vmatpush2.msra.mxu0 0.0
    %1215 = vmatprep.subr.mxu0 0.0
    %1216 = vmatpush2.msra.mxu0 0.0
    %1217 = vmatprep.subr.mxu0 0.0
    %1218 = vmatpush2.msra.mxu0 0.0
    %1219 = vmatprep.subr.mxu0 0.0
    %1220 = vmatpush2.msra.mxu0 0.0
    %1221 = vmatprep.subr.mxu0 0.0
    %1222 = vmatpush2.msra.mxu0 0.0
    %1223 = vmatprep.subr.mxu0 0.0
    %1224 = vmatpush2.msra.mxu0 0.0
    %1225 = vmatprep.subr.mxu0 0.0
    %1226 = vmatpush2.msra.mxu0 0.0
    %1227 = vmatprep.subr.mxu0 0.0
    %1228 = vmatpush2.msra.mxu0 0.0
    %1229 = vmatprep.subr.mxu0 0.0
    %1230 = vmatpush2.msra.mxu0 0.0
    %1231 = vmatprep.subr.mxu0 0.0
    %1232 = vmatpush2.msra.mxu0 0.0
    %1233 = vmatprep.subr.mxu0 0.0
    %1234 = vmatpush2.msra.mxu0 0.0
    %1235 = vmatprep.mubr.f32.mxu0 0.0
    %1236 = vmatmul.mubr.f32.gmra.mxu0 %v1169
    %v1237 = vpop.f32.mrf.mxu0
    %v1238 = vadd.f32 %v1159, %v1237
    %v1239 = vpop.f32.mrf.mxu0
    %v1240 = vadd.f32 %v1163, %v1239
    %1241 = vdwg.mxu0
    %v1242 = vmul.f32 %v1238, %v1238
    %v1243 = vmul.f32 %v1240, %v1240
    %v1244 = vadd.f32 %v1242, %v1243
    %1245 = vadd.xlane.f32.xlu0 %v1244
    %v1246 = vpop.xlane.xlu0 %1245
    %v1247 = vrsqrt.pop %v1246
    %v1248 = vmul.f32 %v1247, 3.1622777
    %v1249 = vmul.f32 %v1238, %v1248
    %v1250 = vmul.f32 %v1240, %v1248
    %s1251 = smul.u32 256, 1
    %s1252 = sshll.u32 %s1251, 4
    %1253 = dma.done [#allocation5], %s1252
    %v1254 = vld [vmem:[#allocation2] sm:$0xff]
    %v1255 = vld [vmem:[#allocation2 + $0x8] sm:$0xff]
    %v1256 = vld [vmem:[#allocation2 + $0x10] sm:$0xff]
    %v1257 = vld [vmem:[#allocation2 + $0x18] sm:$0xff]
    %v1258 = vld [vmem:[#allocation2 + $0x20] sm:$0xff]
    %v1259 = vld [vmem:[#allocation2 + $0x28] sm:$0xff]
    %v1260 = vld [vmem:[#allocation2 + $0x30] sm:$0xff]
    %v1261 = vld [vmem:[#allocation2 + $0x38] sm:$0xff]
    %v1262 = vld [vmem:[#allocation2 + $0x40] sm:$0xff]
    %v1263 = vld [vmem:[#allocation2 + $0x48] sm:$0xff]
    %v1264 = vld [vmem:[#allocation2 + $0x50] sm:$0xff]
    %v1265 = vld [vmem:[#allocation2 + $0x58] sm:$0xff]
    %v1266 = vld [vmem:[#allocation2 + $0x60] sm:$0xff]
    %v1267 = vld [vmem:[#allocation2 + $0x68] sm:$0xff]
    %v1268 = vld [vmem:[#allocation2 + $0x70] sm:$0xff]
    %v1269 = vld [vmem:[#allocation2 + $0x78] sm:$0xff]
    %v1270 = vld [vmem:[#allocation2 + $0x80] sm:$0xff]
    %v1271 = vld [vmem:[#allocation2 + $0x88] sm:$0xff]
    %v1272 = vld [vmem:[#allocation2 + $0x90] sm:$0xff]
    %v1273 = vld [vmem:[#allocation2 + $0x98] sm:$0xff]
    %v1274 = vld [vmem:[#allocation2 + $0xa0] sm:$0xff]
    %v1275 = vld [vmem:[#allocation2 + $0xa8] sm:$0xff]
    %v1276 = vld [vmem:[#allocation2 + $0xb0] sm:$0xff]
    %v1277 = vld [vmem:[#allocation2 + $0xb8] sm:$0xff]
    %v1278 = vld [vmem:[#allocation2 + $0xc0] sm:$0xff]
    %v1279 = vld [vmem:[#allocation2 + $0xc8] sm:$0xff]
    %v1280 = vld [vmem:[#allocation2 + $0xd0] sm:$0xff]
    %v1281 = vld [vmem:[#allocation2 + $0xd8] sm:$0xff]
    %v1282 = vld [vmem:[#allocation2 + $0xe0] sm:$0xff]
    %v1283 = vld [vmem:[#allocation2 + $0xe8] sm:$0xff]
    %v1284 = vld [vmem:[#allocation2 + $0xf0] sm:$0xff]
    %v1285 = vld [vmem:[#allocation2 + $0xf8] sm:$0xff]
    %v1286 = vld [vmem:[%s7] sm:$0x1]
    %v1288 = vlaneseq
    %v1289 = vshrl.u32 %v1288, 7
    %v1290 = vsub.s32 0, %v1289
    %v1291 = vrot.slane %v1286, %v1290
    %1293 = vmatprep.subr.mxu0 0.0
    %1294 = vmatpush1.msra.mxu0 %v1269
    %1295 = vmatprep.subr.mxu0 0.0
    %1296 = vmatpush1.msra.mxu0 %v1268
    %1297 = vmatprep.subr.mxu0 0.0
    %1298 = vmatpush1.msra.mxu0 %v1267
    %1299 = vmatprep.subr.mxu0 0.0
    %1300 = vmatpush1.msra.mxu0 %v1266
    %1301 = vmatprep.subr.mxu0 0.0
    %1302 = vmatpush1.msra.mxu0 %v1265
    %1303 = vmatprep.subr.mxu0 0.0
    %1304 = vmatpush1.msra.mxu0 %v1264
    %1305 = vmatprep.subr.mxu0 0.0
    %1306 = vmatpush1.msra.mxu0 %v1263
    %1307 = vmatprep.subr.mxu0 0.0
    %1308 = vmatpush1.msra.mxu0 %v1262
    %1309 = vmatprep.subr.mxu0 0.0
    %1310 = vmatpush1.msra.mxu0 %v1261
    %1311 = vmatprep.subr.mxu0 0.0
    %1312 = vmatpush1.msra.mxu0 %v1260
    %1313 = vmatprep.subr.mxu0 0.0
    %1314 = vmatpush1.msra.mxu0 %v1259
    %1315 = vmatprep.subr.mxu0 0.0
    %1316 = vmatpush1.msra.mxu0 %v1258
    %1317 = vmatprep.subr.mxu0 0.0
    %1318 = vmatpush1.msra.mxu0 %v1257
    %1319 = vmatprep.subr.mxu0 0.0
    %1320 = vmatpush1.msra.mxu0 %v1256
    %1321 = vmatprep.subr.mxu0 0.0
    %1322 = vmatpush1.msra.mxu0 %v1255
    %1323 = vmatprep.subr.mxu0 0.0
    %1324 = vmatpush1.msra.mxu0 %v1254
    %1325 = vmatprep.subr.mxu0 0.0
    %1326 = vmatpush2.msra.mxu0 %v1285
    %1327 = vmatprep.subr.mxu0 0.0
    %1328 = vmatpush2.msra.mxu0 %v1284
    %1329 = vmatprep.subr.mxu0 0.0
    %1330 = vmatpush2.msra.mxu0 %v1283
    %1331 = vmatprep.subr.mxu0 0.0
    %1332 = vmatpush2.msra.mxu0 %v1282
    %1333 = vmatprep.subr.mxu0 0.0
    %1334 = vmatpush2.msra.mxu0 %v1281
    %1335 = vmatprep.subr.mxu0 0.0
    %1336 = vmatpush2.msra.mxu0 %v1280
    %1337 = vmatprep.subr.mxu0 0.0
    %1338 = vmatpush2.msra.mxu0 %v1279
    %1339 = vmatprep.subr.mxu0 0.0
    %1340 = vmatpush2.msra.mxu0 %v1278
    %1341 = vmatprep.subr.mxu0 0.0
    %1342 = vmatpush2.msra.mxu0 %v1277
    %1343 = vmatprep.subr.mxu0 0.0
    %1344 = vmatpush2.msra.mxu0 %v1276
    %1345 = vmatprep.subr.mxu0 0.0
    %1346 = vmatpush2.msra.mxu0 %v1275
    %1347 = vmatprep.subr.mxu0 0.0
    %1348 = vmatpush2.msra.mxu0 %v1274
    %1349 = vmatprep.subr.mxu0 0.0
    %1350 = vmatpush2.msra.mxu0 %v1273
    %1351 = vmatprep.subr.mxu0 0.0
    %1352 = vmatpush2.msra.mxu0 %v1272
    %1353 = vmatprep.subr.mxu0 0.0
    %1354 = vmatpush2.msra.mxu0 %v1271
    %1355 = vmatprep.subr.mxu0 0.0
    %1356 = vmatpush2.msra.mxu0 %v1270
    %1357 = vmatprep.mubr.f32.mxu0 %v1250
    %1358 = vmatmul.mubr.f32.gmra.mxu0 %v1249
    %v1359 = vpop.f32.mrf.mxu0
    %v1360 = vadd.f32 %v1291, %v1359
    %v1361 = vpop.f32.mrf.mxu0
    %1362 = vdwg.mxu0
    %v1363 = vmax.f32 %v1360, 0.0
    %s1364 = smul.u32 8, 8
    %s1365 = smul.u32 %s1364, 2
    %s1366 = sshll.u32 %s1365, 4
    %1367 = dma.done %s169, %s1366
    %v1368 = vld [vmem:[#allocation3] sm:$0xff]
    %v1369 = vld [vmem:[#allocation3 + $0x8] sm:$0xff]
    %v1370 = vld [vmem:[#allocation3 + $0x10] sm:$0xff]
    %v1371 = vld [vmem:[#allocation3 + $0x18] sm:$0xff]
    %v1372 = vld [vmem:[#allocation3 + $0x20] sm:$0xff]
    %v1373 = vld [vmem:[#allocation3 + $0x28] sm:$0xff]
    %v1374 = vld [vmem:[#allocation3 + $0x30] sm:$0xff]
    %v1375 = vld [vmem:[#allocation3 + $0x38] sm:$0xff]
    %v1376 = vld [vmem:[#allocation3 + $0x40] sm:$0xff]
    %v1377 = vld [vmem:[#allocation3 + $0x48] sm:$0xff]
    %v1378 = vld [vmem:[#allocation3 + $0x50] sm:$0xff]
    %v1379 = vld [vmem:[#allocation3 + $0x58] sm:$0xff]
    %v1380 = vld [vmem:[#allocation3 + $0x60] sm:$0xff]
    %v1381 = vld [vmem:[#allocation3 + $0x68] sm:$0xff]
    %v1382 = vld [vmem:[#allocation3 + $0x70] sm:$0xff]
    %v1383 = vld [vmem:[#allocation3 + $0x78] sm:$0xff]
    %v1384 = vld [vmem:[%s9] sm:$0x3]
    %v1386 = vlaneseq
    %v1387 = vshrl.u32 %v1386, 7
    %v1388 = vsub.s32 0, %v1387
    %v1389 = vrot.slane %v1384, %v1388
    %v1390 = vlaneseq
    %v1391 = vshrl.u32 %v1390, 7
    %v1392 = vsub.s32 1, %v1391
    %v1393 = vrot.slane %v1384, %v1392
    %vm1396 = vcmask 523264
    %v1398 = vsel %vm1396, %v1363, 0
    %1400 = vmatprep.subr.mxu0 0.0
    %1401 = vmatpush1.msra.mxu0 0.0
    %1402 = vmatprep.subr.mxu0 0.0
    %1403 = vmatpush1.msra.mxu0 0.0
    %1404 = vmatprep.subr.mxu0 0.0
    %1405 = vmatpush1.msra.mxu0 0.0
    %1406 = vmatprep.subr.mxu0 0.0
    %1407 = vmatpush1.msra.mxu0 0.0
    %1408 = vmatprep.subr.mxu0 0.0
    %1409 = vmatpush1.msra.mxu0 0.0
    %1410 = vmatprep.subr.mxu0 0.0
    %1411 = vmatpush1.msra.mxu0 0.0
    %1412 = vmatprep.subr.mxu0 0.0
    %1413 = vmatpush1.msra.mxu0 0.0
    %1414 = vmatprep.subr.mxu0 0.0
    %1415 = vmatpush1.msra.mxu0 0.0
    %1416 = vmatprep.subr.mxu0 %v1383
    %1417 = vmatpush1.msra.mxu0 %v1382
    %1418 = vmatprep.subr.mxu0 %v1381
    %1419 = vmatpush1.msra.mxu0 %v1380
    %1420 = vmatprep.subr.mxu0 %v1379
    %1421 = vmatpush1.msra.mxu0 %v1378
    %1422 = vmatprep.subr.mxu0 %v1377
    %1423 = vmatpush1.msra.mxu0 %v1376
    %1424 = vmatprep.subr.mxu0 %v1375
    %1425 = vmatpush1.msra.mxu0 %v1374
    %1426 = vmatprep.subr.mxu0 %v1373
    %1427 = vmatpush1.msra.mxu0 %v1372
    %1428 = vmatprep.subr.mxu0 %v1371
    %1429 = vmatpush1.msra.mxu0 %v1370
    %1430 = vmatprep.subr.mxu0 %v1369
    %1431 = vmatpush1.msra.mxu0 %v1368
    %1432 = vmatprep.subr.mxu0 0.0
    %1433 = vmatpush2.msra.mxu0 0.0
    %1434 = vmatprep.subr.mxu0 0.0
    %1435 = vmatpush2.msra.mxu0 0.0
    %1436 = vmatprep.subr.mxu0 0.0
    %1437 = vmatpush2.msra.mxu0 0.0
    %1438 = vmatprep.subr.mxu0 0.0
    %1439 = vmatpush2.msra.mxu0 0.0
    %1440 = vmatprep.subr.mxu0 0.0
    %1441 = vmatpush2.msra.mxu0 0.0
    %1442 = vmatprep.subr.mxu0 0.0
    %1443 = vmatpush2.msra.mxu0 0.0
    %1444 = vmatprep.subr.mxu0 0.0
    %1445 = vmatpush2.msra.mxu0 0.0
    %1446 = vmatprep.subr.mxu0 0.0
    %1447 = vmatpush2.msra.mxu0 0.0
    %1448 = vmatprep.subr.mxu0 0.0
    %1449 = vmatpush2.msra.mxu0 0.0
    %1450 = vmatprep.subr.mxu0 0.0
    %1451 = vmatpush2.msra.mxu0 0.0
    %1452 = vmatprep.subr.mxu0 0.0
    %1453 = vmatpush2.msra.mxu0 0.0
    %1454 = vmatprep.subr.mxu0 0.0
    %1455 = vmatpush2.msra.mxu0 0.0
    %1456 = vmatprep.subr.mxu0 0.0
    %1457 = vmatpush2.msra.mxu0 0.0
    %1458 = vmatprep.subr.mxu0 0.0
    %1459 = vmatpush2.msra.mxu0 0.0
    %1460 = vmatprep.subr.mxu0 0.0
    %1461 = vmatpush2.msra.mxu0 0.0
    %1462 = vmatprep.subr.mxu0 0.0
    %1463 = vmatpush2.msra.mxu0 0.0
    %1464 = vmatprep.mubr.f32.mxu0 0.0
    %1465 = vmatmul.mubr.f32.gmra.mxu0 %v1398
    %v1466 = vpop.f32.mrf.mxu0
    %v1467 = vadd.f32 %v1389, %v1466
    %v1468 = vpop.f32.mrf.mxu0
    %v1469 = vadd.f32 %v1393, %v1468
    %1470 = vdwg.mxu0
    %s1471 = smul.u32 8, 32
    %s1472 = smul.u32 %s1471, 2
    %s1473 = sshll.u32 %s1472, 4
    %1474 = dma.done %s181, %s1473
    %v1475 = vld [vmem:[#allocation4] sm:$0xff]
    %v1476 = vld [vmem:[#allocation4 + $0x8] sm:$0xff]
    %v1477 = vld [vmem:[#allocation4 + $0x10] sm:$0xff]
    %v1478 = vld [vmem:[#allocation4 + $0x18] sm:$0xff]
    %v1479 = vld [vmem:[#allocation4 + $0x20] sm:$0xff]
    %v1480 = vld [vmem:[#allocation4 + $0x28] sm:$0xff]
    %v1481 = vld [vmem:[#allocation4 + $0x30] sm:$0xff]
    %v1482 = vld [vmem:[#allocation4 + $0x38] sm:$0xff]
    %v1483 = vld [vmem:[#allocation4 + $0x40] sm:$0xff]
    %v1484 = vld [vmem:[#allocation4 + $0x48] sm:$0xff]
    %v1485 = vld [vmem:[#allocation4 + $0x50] sm:$0xff]
    %v1486 = vld [vmem:[#allocation4 + $0x58] sm:$0xff]
    %v1487 = vld [vmem:[#allocation4 + $0x60] sm:$0xff]
    %v1488 = vld [vmem:[#allocation4 + $0x68] sm:$0xff]
    %v1489 = vld [vmem:[#allocation4 + $0x70] sm:$0xff]
    %v1490 = vld [vmem:[#allocation4 + $0x78] sm:$0xff]
    %v1491 = vld [vmem:[#allocation4 + $0x80] sm:$0xff]
    %v1492 = vld [vmem:[#allocation4 + $0x88] sm:$0xff]
    %v1493 = vld [vmem:[#allocation4 + $0x90] sm:$0xff]
    %v1494 = vld [vmem:[#allocation4 + $0x98] sm:$0xff]
    %v1495 = vld [vmem:[#allocation4 + $0xa0] sm:$0xff]
    %v1496 = vld [vmem:[#allocation4 + $0xa8] sm:$0xff]
    %v1497 = vld [vmem:[#allocation4 + $0xb0] sm:$0xff]
    %v1498 = vld [vmem:[#allocation4 + $0xb8] sm:$0xff]
    %v1499 = vld [vmem:[#allocation4 + $0xc0] sm:$0xff]
    %v1500 = vld [vmem:[#allocation4 + $0xc8] sm:$0xff]
    %v1501 = vld [vmem:[#allocation4 + $0xd0] sm:$0xff]
    %v1502 = vld [vmem:[#allocation4 + $0xd8] sm:$0xff]
    %v1503 = vld [vmem:[#allocation4 + $0xe0] sm:$0xff]
    %v1504 = vld [vmem:[#allocation4 + $0xe8] sm:$0xff]
    %v1505 = vld [vmem:[#allocation4 + $0xf0] sm:$0xff]
    %v1506 = vld [vmem:[#allocation4 + $0xf8] sm:$0xff]
    %v1507 = vld [vmem:[#allocation4 + $0x100] sm:$0xff]
    %v1508 = vld [vmem:[#allocation4 + $0x108] sm:$0xff]
    %v1509 = vld [vmem:[#allocation4 + $0x110] sm:$0xff]
    %v1510 = vld [vmem:[#allocation4 + $0x118] sm:$0xff]
    %v1511 = vld [vmem:[#allocation4 + $0x120] sm:$0xff]
    %v1512 = vld [vmem:[#allocation4 + $0x128] sm:$0xff]
    %v1513 = vld [vmem:[#allocation4 + $0x130] sm:$0xff]
    %v1514 = vld [vmem:[#allocation4 + $0x138] sm:$0xff]
    %v1515 = vld [vmem:[#allocation4 + $0x140] sm:$0xff]
    %v1516 = vld [vmem:[#allocation4 + $0x148] sm:$0xff]
    %v1517 = vld [vmem:[#allocation4 + $0x150] sm:$0xff]
    %v1518 = vld [vmem:[#allocation4 + $0x158] sm:$0xff]
    %v1519 = vld [vmem:[#allocation4 + $0x160] sm:$0xff]
    %v1520 = vld [vmem:[#allocation4 + $0x168] sm:$0xff]
    %v1521 = vld [vmem:[#allocation4 + $0x170] sm:$0xff]
    %v1522 = vld [vmem:[#allocation4 + $0x178] sm:$0xff]
    %v1523 = vld [vmem:[#allocation4 + $0x180] sm:$0xff]
    %v1524 = vld [vmem:[#allocation4 + $0x188] sm:$0xff]
    %v1525 = vld [vmem:[#allocation4 + $0x190] sm:$0xff]
    %v1526 = vld [vmem:[#allocation4 + $0x198] sm:$0xff]
    %v1527 = vld [vmem:[#allocation4 + $0x1a0] sm:$0xff]
    %v1528 = vld [vmem:[#allocation4 + $0x1a8] sm:$0xff]
    %v1529 = vld [vmem:[#allocation4 + $0x1b0] sm:$0xff]
    %v1530 = vld [vmem:[#allocation4 + $0x1b8] sm:$0xff]
    %v1531 = vld [vmem:[#allocation4 + $0x1c0] sm:$0xff]
    %v1532 = vld [vmem:[#allocation4 + $0x1c8] sm:$0xff]
    %v1533 = vld [vmem:[#allocation4 + $0x1d0] sm:$0xff]
    %v1534 = vld [vmem:[#allocation4 + $0x1d8] sm:$0xff]
    %v1535 = vld [vmem:[#allocation4 + $0x1e0] sm:$0xff]
    %v1536 = vld [vmem:[#allocation4 + $0x1e8] sm:$0xff]
    %v1537 = vld [vmem:[#allocation4 + $0x1f0] sm:$0xff]
    %v1538 = vld [vmem:[#allocation4 + $0x1f8] sm:$0xff]
    %v1539 = vld [vmem:[%s11] sm:$0x3]
    %v1541 = vlaneseq
    %v1542 = vshrl.u32 %v1541, 7
    %v1543 = vsub.s32 0, %v1542
    %v1544 = vrot.slane %v1539, %v1543
    %v1545 = vlaneseq
    %v1546 = vshrl.u32 %v1545, 7
    %v1547 = vsub.s32 1, %v1546
    %v1548 = vrot.slane %v1539, %v1547
    %1551 = vmatprep.subr.mxu0 %v1506
    %1552 = vmatpush1.msra.mxu0 %v1505
    %1553 = vmatprep.subr.mxu0 %v1504
    %1554 = vmatpush1.msra.mxu0 %v1503
    %1555 = vmatprep.subr.mxu0 %v1502
    %1556 = vmatpush1.msra.mxu0 %v1501
    %1557 = vmatprep.subr.mxu0 %v1500
    %1558 = vmatpush1.msra.mxu0 %v1499
    %1559 = vmatprep.subr.mxu0 %v1498
    %1560 = vmatpush1.msra.mxu0 %v1497
    %1561 = vmatprep.subr.mxu0 %v1496
    %1562 = vmatpush1.msra.mxu0 %v1495
    %1563 = vmatprep.subr.mxu0 %v1494
    %1564 = vmatpush1.msra.mxu0 %v1493
    %1565 = vmatprep.subr.mxu0 %v1492
    %1566 = vmatpush1.msra.mxu0 %v1491
    %1567 = vmatprep.subr.mxu0 %v1490
    %1568 = vmatpush1.msra.mxu0 %v1489
    %1569 = vmatprep.subr.mxu0 %v1488
    %1570 = vmatpush1.msra.mxu0 %v1487
    %1571 = vmatprep.subr.mxu0 %v1486
    %1572 = vmatpush1.msra.mxu0 %v1485
    %1573 = vmatprep.subr.mxu0 %v1484
    %1574 = vmatpush1.msra.mxu0 %v1483
    %1575 = vmatprep.subr.mxu0 %v1482
    %1576 = vmatpush1.msra.mxu0 %v1481
    %1577 = vmatprep.subr.mxu0 %v1480
    %1578 = vmatpush1.msra.mxu0 %v1479
    %1579 = vmatprep.subr.mxu0 %v1478
    %1580 = vmatpush1.msra.mxu0 %v1477
    %1581 = vmatprep.subr.mxu0 %v1476
    %1582 = vmatpush1.msra.mxu0 %v1475
    %1583 = vmatprep.subr.mxu0 %v1538
    %1584 = vmatpush2.msra.mxu0 %v1537
    %1585 = vmatprep.subr.mxu0 %v1536
    %1586 = vmatpush2.msra.mxu0 %v1535
    %1587 = vmatprep.subr.mxu0 %v1534
    %1588 = vmatpush2.msra.mxu0 %v1533
    %1589 = vmatprep.subr.mxu0 %v1532
    %1590 = vmatpush2.msra.mxu0 %v1531
    %1591 = vmatprep.subr.mxu0 %v1530
    %1592 = vmatpush2.msra.mxu0 %v1529
    %1593 = vmatprep.subr.mxu0 %v1528
    %1594 = vmatpush2.msra.mxu0 %v1527
    %1595 = vmatprep.subr.mxu0 %v1526
    %1596 = vmatpush2.msra.mxu0 %v1525
    %1597 = vmatprep.subr.mxu0 %v1524
    %1598 = vmatpush2.msra.mxu0 %v1523
    %1599 = vmatprep.subr.mxu0 %v1522
    %1600 = vmatpush2.msra.mxu0 %v1521
    %1601 = vmatprep.subr.mxu0 %v1520
    %1602 = vmatpush2.msra.mxu0 %v1519
    %1603 = vmatprep.subr.mxu0 %v1518
    %1604 = vmatpush2.msra.mxu0 %v1517
    %1605 = vmatprep.subr.mxu0 %v1516
    %1606 = vmatpush2.msra.mxu0 %v1515
    %1607 = vmatprep.subr.mxu0 %v1514
    %1608 = vmatpush2.msra.mxu0 %v1513
    %1609 = vmatprep.subr.mxu0 %v1512
    %1610 = vmatpush2.msra.mxu0 %v1511
    %1611 = vmatprep.subr.mxu0 %v1510
    %1612 = vmatpush2.msra.mxu0 %v1509
    %1613 = vmatprep.subr.mxu0 %v1508
    %1614 = vmatpush2.msra.mxu0 %v1507
    %1615 = vmatprep.mubr.f32.mxu0 %v1469
    %1616 = vmatmul.mubr.f32.gmra.mxu0 %v1467
    %v1617 = vpop.f32.mrf.mxu0
    %v1618 = vadd.f32 %v1544, %v1617
    %v1619 = vpop.f32.mrf.mxu0
    %v1620 = vadd.f32 %v1548, %v1619
    %1621 = vdwg.mxu0
    %v1622 = vtanh.pop %v1618
    %v1623 = vtanh.pop %v1620
    %1624 = vst [vmem:[#allocation11] sm:$0xff] %v1622
    %1625 = vst [vmem:[#allocation11 + $0x8] sm:$0xff] %v1623
    // Predicated region
    $region88: #{tpu_custom_call.1} parent=1 // pred_check
      _
    $region89: #{tpu_custom_call.1} parent=1 // pred_check_branch
      %1627 = sbr.rel (0) target = $region91
    $region90: #{tpu_custom_call.1} parent=1 // pred_region
      %s1629 = ssub.s32 256, 256
      %1630 = vsyncadd [#allocation8], %s1629
      %s1632 = sshll.u32 [#allocation11], 4
      %s1633 = int_to_ptr.vmem [resolvable:$true] %s1632
      %1635 = dma.vmem_to_hbm [thread:$0]  %s1633, 256, %s12, [#allocation8]
    $region91: #{tpu_custom_call.1} parent=1 // pred_fallthru
      _
    // Predicated region
    $region92: #{tpu_custom_call.1} parent=1 // pred_check
      _
    $region93: #{tpu_custom_call.1} parent=1 // pred_check_branch
      %1637 = sbr.rel (0) target = $region95
    $region94: #{tpu_custom_call.1} parent=1 // pred_region
      %1638 = dma.done [#allocation8], 256
    $region95: #{tpu_custom_call.1} parent=1 // pred_fallthru
      _
    %1639 = vsyncpa [#allocation7], 1
    %1640 = vsyncpa [#allocation10], 1
    %1641 = vsyncpa [#allocation8], 1
  %1642 = vsyncmov [#allocation5]
  %s1643 = vpop.sfrf %1642
  %p1644 = scmp.eq.s32.totalorder %s1643, 0
  %p1645 = pneg %p1644
  %1647 = shalt.err (%p1645)
  %s1648 = scalar_lea.sflag [#allocation5], 1
  %1649 = vsyncmov %s1648
  %s1650 = vpop.sfrf %1649
  %p1651 = scmp.eq.s32.totalorder %s1650, 0
  %p1652 = pneg %p1651
  %1654 = shalt.err (%p1652)
  %s1655 = scalar_lea.sflag [#allocation5], 2
  %1656 = vsyncmov %s1655
  %s1657 = vpop.sfrf %1656
  %p1658 = scmp.eq.s32.totalorder %s1657, 0
  %p1659 = pneg %p1658
  %1661 = shalt.err (%p1659)

</llo_original>
